<compile_context>
chip_gen: v7x
topology: tpu7x:2x2x1
jax: 0.10.0
libtpu: 0.0.40
codegen_flags: <defaults>
</compile_context>

<pallas_src>
import jax
import jax.numpy as jnp
from jax import lax
from jax.experimental import pallas as pl
from jax.experimental.pallas import tpu as pltpu


_LANE = 128


def _ceil_to(x: int, m: int) -> int:
    return ((x + m - 1) // m) * m


def _sublane_pack(dtype) -> int:
    # rows per packed vreg group: 8 for 4-byte, 16 for 2-byte, 32 for 1-byte.
    return {4: 8, 2: 16, 1: 32}.get(jnp.dtype(dtype).itemsize, 8)


def _vmem_capacity_bytes() -> int:
    try:
        return int(pltpu.get_tpu_info().vmem_capacity_bytes)
    except Exception:
        return 64 * 1024 * 1024      # conservative default (v7x per-TensorCore VMEM)


def _pick_s_chunk(S: int, TP: int, N_pad: int) -> int:
    # Keep the per-chunk one-hot slab (~8 B/elem across bf16 copies + temps) <= ~4 MiB.
    cap = max(1, (4 * 1024 * 1024) // (TP * N_pad * 8))
    desired = max(1, min(8, cap, S))
    for d in range(desired, 0, -1):
        if S % d == 0:
            return d
    return 1


def _estimate_vmem_bytes(TP, N_pad, out_c_pad, S, S_chunk, esz) -> int:
    # Double-buffered pipeline blocks.
    blocks = 2 * esz * (TP * 3 + 3 * N_pad + out_c_pad * N_pad + out_c_pad * TP)
    blocks += 2 * esz * (S * out_c_pad * TP)
    # In-kernel temporaries.
    tmp = 5 * TP * N_pad * 4                       # d2 / in_ball / scan / rank / fb
    tmp += 3 * S_chunk * TP * N_pad * 2            # per-chunk one-hots (bf16) + concat
    tmp += out_c_pad * N_pad * (4 + 2 + 2)         # srcf + hi + lo
    tmp += 2 * out_c_pad * S_chunk * TP * 4        # matmul results
    return blocks + tmp


def _pick_p_tile(P_pad, N_pad, out_c_pad, S, esz, budget) -> int:
    for cand in (512, 256, 128):
        if P_pad % cand:
            continue
        sc = _pick_s_chunk(S, cand, N_pad)
        if _estimate_vmem_bytes(cand, N_pad, out_c_pad, S, sc, esz) <= budget:
            return cand
    return _LANE            # P_pad is always a multiple of 128


def _make_kernel(*, N_pad, TP, S, S_chunk, out_c_pad, r2, do_lo):
    f32 = jnp.float32
    bf16 = jnp.bfloat16
    n_chunks = S // S_chunk
    dn = (((1,), (1,)), ((), ()))          # contract last dims: src @ G^T

    def kernel(new_pc_ref, xyz_ref, src_ref, corr_ref, out_ref):
        xyzf = xyz_ref[0].astype(f32)          # (3, N_pad)       points, channel-first
        new_pc = new_pc_ref[0].astype(f32)     # (TP, 3)          centroids, point-first
        srcf = src_ref[0].astype(f32)          # (out_c_pad, N_pad) gather source
        corrf = corr_ref[0].astype(f32)        # (out_c_pad, TP)  centroid correction

        # ---- squared distances (TP, N_pad): direct sum of squares on the VPU ----
        d2 = None
        for d in range(3):                     # static, 3 coords
            diff = new_pc[:, d:d + 1] - xyzf[d:d + 1, :]      # (TP,1)-(1,N) -> (TP,N)
            sq = diff * diff
            d2 = sq if d2 is None else d2 + sq
        in_ball = jnp.where(d2 < r2, 1.0, 0.0)                # (TP, N_pad) f32 0/1

        # ---- exclusive rank per point: log2(N) shift-and-add prefix sum ----
        lane_iota = lax.broadcasted_iota(jnp.int32, (1, N_pad), 1)
        inc = in_ball
        shift = 1
        while shift < N_pad:
            rolled = pltpu.roll(inc, shift, 1)                # rolled[j] = inc[(j-shift)%N]
            inc = inc + jnp.where(lane_iota >= shift, rolled, 0.0)
            shift *= 2
        rank = inc - in_ball                                  # exclusive prefix count
        count = inc[:, N_pad - 1:N_pad]                       # (TP, 1) total in-ball count

        # Fallback one-hot: first in-ball point, or point 0 when the ball is empty.
        first_oh = jnp.where(rank == 0.0, in_ball, 0.0)       # (TP, N_pad)
        fb = jnp.where(count > 0.0, first_oh,
                       jnp.where(lane_iota == 0, 1.0, 0.0))
        fb_bf = fb.astype(bf16)
        in_ball_bf = in_ball.astype(bf16)

        # hi/lo bf16 split of the gather source: the one-hot gather is exact, so
        # hi + lo recovers ~f32 accuracy from two native bf16 MXU passes.
        src_hi = srcf.astype(bf16)
        src_lo = (srcf - src_hi.astype(f32)).astype(bf16)

        def chunk_body(ci, carry):
            s0 = ci * S_chunk
            onehots = []
            for j in range(S_chunk):                          # static unroll within chunk
                s_f = (s0 + j).astype(f32)
                active = jnp.where(rank == s_f, in_ball_bf, 0.0)     # (TP, N_pad) bf16
                onehots.append(jnp.where(count > s_f, active, fb_bf))
            G = onehots[0] if S_chunk == 1 else jnp.concatenate(onehots, axis=0)
            g = lax.dot_general(src_hi, G, dn, preferred_element_type=f32)
            if do_lo:
                g = g + lax.dot_general(src_lo, G, dn, preferred_element_type=f32)
            for j in range(S_chunk):
                gj = g[:, j * TP:(j + 1) * TP] - corrf        # rel-xyz rows only (rest 0)
                row0 = pl.multiple_of((s0 + j) * out_c_pad, out_c_pad)
                out_ref[0, pl.ds(row0, out_c_pad), :] = gj.astype(out_ref.dtype)
            return carry

        unroll = True if n_chunks <= 4 else 2
        lax.fori_loop(0, n_chunks, chunk_body, 0, unroll=unroll)

    return kernel


def query_and_group(xyz, new_xyz, features=None, *, radius, nsample, use_xyz=True,
                    p_tile=None):
    """JAX/Pallas equivalent of QueryAndGroup.forward.

    xyz:      (B, N, 3) float
    new_xyz:  (B, P, 3) float
    features: (B, C, N) float or None
    returns:  (B, 3+C, P, nsample)  (or (B, C, P, nsample) / (B, 3, P, nsample))
    """
    B, N, _ = xyz.shape
    P = new_xyz.shape[1]
    S = int(nsample)
    assert S >= 1
    assert N < (1 << 24), "float index/rank bookkeeping requires N < 2^24"
    r2 = float(radius) * float(radius)

    has_features = features is not None
    if not has_features:
        assert use_xyz, "Cannot have not features and not use xyz as a feature!"
    C = features.shape[1] if has_features else 0
    xyz_rows = use_xyz or not has_features          # output carries relative-xyz rows
    out_c = (3 if xyz_rows else 0) + C

    dt = jnp.result_type(xyz.dtype, features.dtype) if has_features else xyz.dtype
    esz = jnp.dtype(dt).itemsize
    out_c_pad = _ceil_to(out_c, _sublane_pack(dt))

    N_pad = _ceil_to(max(N, 1), _LANE)
    P_pad = _ceil_to(max(P, 1), _LANE)

    # ---- host-side layout prep: channel-first, pre-concatenated, padded ----
    xyz_cf = jnp.swapaxes(xyz, 1, 2).astype(dt)               # (B, 3, N)
    new_cf = jnp.swapaxes(new_xyz, 1, 2).astype(dt)           # (B, 3, P)

    parts = []
    if xyz_rows:
        parts.append(xyz_cf)
    if has_features:
        parts.append(features.astype(dt))
    src = parts[0] if len(parts) == 1 else jnp.concatenate(parts, axis=1)   # (B,out_c,N)
    if out_c_pad > out_c:
        src = jnp.concatenate([src, jnp.zeros((B, out_c_pad - out_c, N), dt)], axis=1)

    if xyz_rows:
        corr = new_cf
        if out_c_pad > 3:
            corr = jnp.concatenate([corr, jnp.zeros((B, out_c_pad - 3, P), dt)], axis=1)
    else:
        corr = jnp.zeros((B, out_c_pad, P), dt)               # nothing to subtract

    new_pc = new_xyz.astype(dt)                               # (B, P, 3)

    if N_pad > N:
        # Sentinel coordinates keep padded points strictly outside every ball.
        xyz_cf = jnp.concatenate(
            [xyz_cf, jnp.full((B, 3, N_pad - N), 1e18, dt)], axis=2)
        src = jnp.concatenate([src, jnp.zeros((B, out_c_pad, N_pad - N), dt)], axis=2)
    if P_pad > P:
        new_pc = jnp.concatenate([new_pc, jnp.zeros((B, P_pad - P, 3), dt)], axis=1)
        corr = jnp.concatenate([corr, jnp.zeros((B, out_c_pad, P_pad - P), dt)], axis=2)

    # ---- generation-aware tiling / VMEM budget ----
    vmem_cap = _vmem_capacity_bytes()
    budget = int(0.45 * vmem_cap)
    if p_tile is not None:
        TP = int(p_tile)
        assert P_pad % TP == 0, "p_tile must divide the padded centroid count"
    else:
        TP = _pick_p_tile(P_pad, N_pad, out_c_pad, S, esz, budget)
    n_ptiles = P_pad // TP
    S_chunk = _pick_s_chunk(S, TP, N_pad)
    do_lo = esz >= 4                     # skip the lo matmul for bf16/fp8 inputs

    est = _estimate_vmem_bytes(TP, N_pad, out_c_pad, S, S_chunk, esz)
    vmem_limit = int(min(max(est * 13 // 10, 32 * 1024 * 1024), int(0.8 * vmem_cap)))
    # TODO(synk): add an N-chunking path (inner loop over point-cloud chunks carrying
    # count/rank offsets) so very large N stays within the VMEM budget.

    kernel = _make_kernel(N_pad=N_pad, TP=TP, S=S, S_chunk=S_chunk,
                          out_c_pad=out_c_pad, r2=r2, do_lo=do_lo)

    passes = 2 if do_lo else 1
    gather_flops = 2.0 * passes * B * P_pad * S * out_c_pad * N_pad
    scan_flops = 2.0 * B * P_pad * N_pad * max(1, N_pad.bit_length())
    dist_flops = 9.0 * B * P_pad * N_pad
    slot_flops = 3.0 * B * P_pad * N_pad * S
    bytes_accessed = esz * (B * (3 + out_c_pad) * N_pad
                            + B * (3 + out_c_pad) * P_pad
                            + B * S * out_c_pad * P_pad)

    out3 = pl.pallas_call(
        kernel,
        out_shape=jax.ShapeDtypeStruct((B, S * out_c_pad, P_pad), dt),
        grid_spec=pltpu.PrefetchScalarGridSpec(
            num_scalar_prefetch=0,
            grid=(B, n_ptiles),
            in_specs=[
                pl.BlockSpec((1, TP, 3), lambda b, pt: (b, pt, 0)),            # centroids
                pl.BlockSpec((1, 3, N_pad), lambda b, pt: (b, 0, 0)),          # points
                pl.BlockSpec((1, out_c_pad, N_pad), lambda b, pt: (b, 0, 0)),  # gather src
                pl.BlockSpec((1, out_c_pad, TP), lambda b, pt: (b, 0, pt)),    # correction
            ],
            out_specs=pl.BlockSpec((1, S * out_c_pad, TP), lambda b, pt: (b, 0, pt)),
        ),
        compiler_params=pltpu.CompilerParams(
            dimension_semantics=("parallel", "parallel"),
            vmem_limit_bytes=vmem_limit,
        ),
        cost_estimate=pl.CostEstimate(
            flops=int(gather_flops + scan_flops + dist_flops + slot_flops),
            transcendentals=0,
            bytes_accessed=int(bytes_accessed),
        ),
    )(new_pc, xyz_cf, src, corr)

    # (B, S*out_c_pad, P_pad) -> (B, S, out_c_pad, P_pad) -> (B, out_c, P, S)
    out4 = out3.reshape(B, S, out_c_pad, P_pad)[:, :, :out_c, :P]
    # TODO(synk): expose the kernel-native (B, S, C, P) slab to consumers that accept it,
    # to skip this lane-sparse (last dim = nsample) transpose round-trip.
    return jnp.transpose(out4, (0, 2, 3, 1))


def _reference_query_and_group(xyz, new_xyz, features, radius, nsample, use_xyz):
    """Pure numpy reference mirroring the PyTorch CUDA ball_query + grouping."""
    import numpy as np
    xyz = np.asarray(xyz, np.float32)
    new_xyz = np.asarray(new_xyz, np.float32)
    B, N, _ = xyz.shape
    P = new_xyz.shape[1]
    idx = np.zeros((B, P, nsample), np.int64)
    for b in range(B):
        for p in range(P):
            cnt = 0
            for n in range(N):
                d2 = float(((new_xyz[b, p] - xyz[b, n]) ** 2).sum())
                if d2 < radius * radius:
                    if cnt == 0:
                        idx[b, p, :] = n
                    idx[b, p, cnt] = n
                    cnt += 1
                    if cnt >= nsample:
                        break
    grouped_xyz = np.zeros((B, 3, P, nsample), np.float32)
    for b in range(B):
        g = xyz[b][idx[b]]                                      # (P, S, 3)
        grouped_xyz[b] = np.transpose(g - new_xyz[b][:, None, :], (2, 0, 1))
    if features is not None:
        features = np.asarray(features, np.float32)
        gfeat = np.stack([features[b][:, idx[b]] for b in range(B)], axis=0)  # (B,C,P,S)
        if use_xyz:
            return np.concatenate([grouped_xyz, gfeat], axis=1)
        return gfeat
    return grouped_xyz


if __name__ == "__main__":
    import numpy as np

    # Small deterministic example.
    B, N, P, S, C = 2, 16, 8, 4, 4
    radius = 0.5

    key = jax.random.PRNGKey(0)
    k1, k2 = jax.random.split(key)
    xyz = jax.random.uniform(k1, (B, N, 3), dtype=jnp.float32)     # points in unit cube
    new_xyz = xyz[:, :P, :]                                        # centroids = subset of xyz
    features = jax.random.normal(k2, (B, C, N), dtype=jnp.float32)

    new_features = query_and_group(xyz, new_xyz, features,
                                   radius=radius, nsample=S, use_xyz=True)
    new_features = jax.block_until_ready(new_features)
    assert new_features.shape == (B, 3 + C, P, S), new_features.shape
    assert bool(jnp.all(jnp.isfinite(new_features)))

    ref = _reference_query_and_group(np.asarray(xyz), np.asarray(new_xyz),
                                     np.asarray(features), radius, S, True)
    np.testing.assert_allclose(np.asarray(new_features), ref, rtol=1e-4, atol=1e-4)

    # Also exercise the features=None path (use_xyz must be True).
    only_xyz = jax.block_until_ready(
        query_and_group(xyz, new_xyz, None, radius=radius, nsample=S, use_xyz=True))
    assert only_xyz.shape == (B, 3, P, S)
    ref_xyz = _reference_query_and_group(np.asarray(xyz), np.asarray(new_xyz),
                                         None, radius, S, True)
    np.testing.assert_allclose(np.asarray(only_xyz), ref_xyz, rtol=1e-4, atol=1e-4)

    print("KERNEL_OK")
</pallas_src>

<mosaic_0001>
module attributes {stable_mosaic.version = 11 : i64} {
  func.func @kernel(%arg0: i32, %arg1: i32, %arg2: memref<1x128x3xf32, #tpu.memory_space<vmem>>, %arg3: memref<1x3x128xf32, #tpu.memory_space<vmem>>, %arg4: memref<1x8x128xf32, #tpu.memory_space<vmem>>, %arg5: memref<1x8x128xf32, #tpu.memory_space<vmem>>, %arg6: memref<1x32x128xf32, #tpu.memory_space<vmem>>) attributes {dimension_semantics = [#tpu.dimension_semantics<parallel>, #tpu.dimension_semantics<parallel>], iteration_bounds = array<i64: 2, 1>, scalar_prefetch = 0 : i64, scratch_operands = 0 : i64, tpu.core_type = #tpu.core_type<tc>, window_params = [{transform_indices = @transform_0, window_bounds = array<i64: 1, 128, 3>}, {transform_indices = @transform_1, window_bounds = array<i64: 1, 3, 128>}, {transform_indices = @transform_2, window_bounds = array<i64: 1, 8, 128>}, {transform_indices = @transform_3, window_bounds = array<i64: 1, 8, 128>}, {transform_indices = @transform_4, window_bounds = array<i64: 1, 32, 128>}]} {
    %c0 = arith.constant 0 : index
    %c0_0 = arith.constant 0 : index
    %c0_1 = arith.constant 0 : index
    %0 = vector.load %arg3[%c0, %c0_0, %c0_1] : memref<1x3x128xf32, #tpu.memory_space<vmem>>, vector<1x3x128xf32>
    %1 = vector.shape_cast %0 : vector<1x3x128xf32> to vector<3x128xf32>
    %c0_2 = arith.constant 0 : index
    %c0_3 = arith.constant 0 : index
    %c0_4 = arith.constant 0 : index
    %2 = vector.load %arg2[%c0_2, %c0_3, %c0_4] : memref<1x128x3xf32, #tpu.memory_space<vmem>>, vector<1x128x3xf32>
    %3 = vector.shape_cast %2 : vector<1x128x3xf32> to vector<128x3xf32>
    %c0_5 = arith.constant 0 : index
    %c0_6 = arith.constant 0 : index
    %c0_7 = arith.constant 0 : index
    %4 = vector.load %arg4[%c0_5, %c0_6, %c0_7] : memref<1x8x128xf32, #tpu.memory_space<vmem>>, vector<1x8x128xf32>
    %5 = vector.shape_cast %4 : vector<1x8x128xf32> to vector<8x128xf32>
    %c0_8 = arith.constant 0 : index
    %c0_9 = arith.constant 0 : index
    %c0_10 = arith.constant 0 : index
    %6 = vector.load %arg5[%c0_8, %c0_9, %c0_10] : memref<1x8x128xf32, #tpu.memory_space<vmem>>, vector<1x8x128xf32>
    %7 = vector.shape_cast %6 : vector<1x8x128xf32> to vector<8x128xf32>
    %8 = vector.extract_strided_slice %3 {offsets = [0, 0], sizes = [128, 1], strides = [1, 1]} : vector<128x3xf32> to vector<128x1xf32>
    %9 = vector.extract_strided_slice %1 {offsets = [0, 0], sizes = [1, 128], strides = [1, 1]} : vector<3x128xf32> to vector<1x128xf32>
    %10 = vector.broadcast %8 : vector<128x1xf32> to vector<128x128xf32>
    %11 = vector.broadcast %9 : vector<1x128xf32> to vector<128x128xf32>
    %12 = arith.subf %10, %11 : vector<128x128xf32>
    %13 = arith.mulf %12, %12 : vector<128x128xf32>
    %14 = vector.extract_strided_slice %3 {offsets = [0, 1], sizes = [128, 1], strides = [1, 1]} : vector<128x3xf32> to vector<128x1xf32>
    %15 = vector.extract_strided_slice %1 {offsets = [1, 0], sizes = [1, 128], strides = [1, 1]} : vector<3x128xf32> to vector<1x128xf32>
    %16 = vector.broadcast %14 : vector<128x1xf32> to vector<128x128xf32>
    %17 = vector.broadcast %15 : vector<1x128xf32> to vector<128x128xf32>
    %18 = arith.subf %16, %17 : vector<128x128xf32>
    %19 = arith.mulf %18, %18 : vector<128x128xf32>
    %20 = arith.addf %13, %19 : vector<128x128xf32>
    %21 = vector.extract_strided_slice %3 {offsets = [0, 2], sizes = [128, 1], strides = [1, 1]} : vector<128x3xf32> to vector<128x1xf32>
    %22 = vector.extract_strided_slice %1 {offsets = [2, 0], sizes = [1, 128], strides = [1, 1]} : vector<3x128xf32> to vector<1x128xf32>
    %23 = vector.broadcast %21 : vector<128x1xf32> to vector<128x128xf32>
    %24 = vector.broadcast %22 : vector<1x128xf32> to vector<128x128xf32>
    %25 = arith.subf %23, %24 : vector<128x128xf32>
    %26 = arith.mulf %25, %25 : vector<128x128xf32>
    %27 = arith.addf %20, %26 : vector<128x128xf32>
    %cst = arith.constant 2.500000e-01 : f32
    %28 = vector.broadcast %cst : f32 to vector<128x128xf32>
    %29 = arith.cmpf olt, %27, %28 : vector<128x128xf32>
    %cst_11 = arith.constant 1.000000e+00 : f32
    %cst_12 = arith.constant 0.000000e+00 : f32
    %30 = vector.broadcast %cst_11 : f32 to vector<128x128xf32>
    %31 = vector.broadcast %cst_12 : f32 to vector<128x128xf32>
    %32 = arith.select %29, %30, %31 : vector<128x128xi1>, vector<128x128xf32>
    %33 = tpu.iota {dimensions = array<i32: 1>} : vector<1x128xi32>
    %c1_i32 = arith.constant 1 : i32
    %34 = tpu.dynamic_rotate %32 by %c1_i32 dim 1 : vector<128x128xf32>, i32 -> vector<128x128xf32>
    %c1_i32_13 = arith.constant 1 : i32
    %35 = vector.broadcast %c1_i32_13 : i32 to vector<1x128xi32>
    %36 = arith.cmpi sge, %33, %35 : vector<1x128xi32>
    %cst_14 = arith.constant 0.000000e+00 : f32
    %37 = vector.shape_cast %36 : vector<1x128xi1> to vector<1x128xi1>
    %38 = vector.broadcast %37 : vector<1x128xi1> to vector<128x128xi1>
    %39 = vector.broadcast %cst_14 : f32 to vector<128x128xf32>
    %40 = arith.select %38, %34, %39 : vector<128x128xi1>, vector<128x128xf32>
    %41 = arith.addf %32, %40 : vector<128x128xf32>
    %c2_i32 = arith.constant 2 : i32
    %42 = tpu.dynamic_rotate %41 by %c2_i32 dim 1 : vector<128x128xf32>, i32 -> vector<128x128xf32>
    %c2_i32_15 = arith.constant 2 : i32
    %43 = vector.broadcast %c2_i32_15 : i32 to vector<1x128xi32>
    %44 = arith.cmpi sge, %33, %43 : vector<1x128xi32>
    %cst_16 = arith.constant 0.000000e+00 : f32
    %45 = vector.shape_cast %44 : vector<1x128xi1> to vector<1x128xi1>
    %46 = vector.broadcast %45 : vector<1x128xi1> to vector<128x128xi1>
    %47 = vector.broadcast %cst_16 : f32 to vector<128x128xf32>
    %48 = arith.select %46, %42, %47 : vector<128x128xi1>, vector<128x128xf32>
    %49 = arith.addf %41, %48 : vector<128x128xf32>
    %c4_i32 = arith.constant 4 : i32
    %50 = tpu.dynamic_rotate %49 by %c4_i32 dim 1 : vector<128x128xf32>, i32 -> vector<128x128xf32>
    %c4_i32_17 = arith.constant 4 : i32
    %51 = vector.broadcast %c4_i32_17 : i32 to vector<1x128xi32>
    %52 = arith.cmpi sge, %33, %51 : vector<1x128xi32>
    %cst_18 = arith.constant 0.000000e+00 : f32
    %53 = vector.shape_cast %52 : vector<1x128xi1> to vector<1x128xi1>
    %54 = vector.broadcast %53 : vector<1x128xi1> to vector<128x128xi1>
    %55 = vector.broadcast %cst_18 : f32 to vector<128x128xf32>
    %56 = arith.select %54, %50, %55 : vector<128x128xi1>, vector<128x128xf32>
    %57 = arith.addf %49, %56 : vector<128x128xf32>
    %c8_i32 = arith.constant 8 : i32
    %58 = tpu.dynamic_rotate %57 by %c8_i32 dim 1 : vector<128x128xf32>, i32 -> vector<128x128xf32>
    %c8_i32_19 = arith.constant 8 : i32
    %59 = vector.broadcast %c8_i32_19 : i32 to vector<1x128xi32>
    %60 = arith.cmpi sge, %33, %59 : vector<1x128xi32>
    %cst_20 = arith.constant 0.000000e+00 : f32
    %61 = vector.shape_cast %60 : vector<1x128xi1> to vector<1x128xi1>
    %62 = vector.broadcast %61 : vector<1x128xi1> to vector<128x128xi1>
    %63 = vector.broadcast %cst_20 : f32 to vector<128x128xf32>
    %64 = arith.select %62, %58, %63 : vector<128x128xi1>, vector<128x128xf32>
    %65 = arith.addf %57, %64 : vector<128x128xf32>
    %c16_i32 = arith.constant 16 : i32
    %66 = tpu.dynamic_rotate %65 by %c16_i32 dim 1 : vector<128x128xf32>, i32 -> vector<128x128xf32>
    %c16_i32_21 = arith.constant 16 : i32
    %67 = vector.broadcast %c16_i32_21 : i32 to vector<1x128xi32>
    %68 = arith.cmpi sge, %33, %67 : vector<1x128xi32>
    %cst_22 = arith.constant 0.000000e+00 : f32
    %69 = vector.shape_cast %68 : vector<1x128xi1> to vector<1x128xi1>
    %70 = vector.broadcast %69 : vector<1x128xi1> to vector<128x128xi1>
    %71 = vector.broadcast %cst_22 : f32 to vector<128x128xf32>
    %72 = arith.select %70, %66, %71 : vector<128x128xi1>, vector<128x128xf32>
    %73 = arith.addf %65, %72 : vector<128x128xf32>
    %c32_i32 = arith.constant 32 : i32
    %74 = tpu.dynamic_rotate %73 by %c32_i32 dim 1 : vector<128x128xf32>, i32 -> vector<128x128xf32>
    %c32_i32_23 = arith.constant 32 : i32
    %75 = vector.broadcast %c32_i32_23 : i32 to vector<1x128xi32>
    %76 = arith.cmpi sge, %33, %75 : vector<1x128xi32>
    %cst_24 = arith.constant 0.000000e+00 : f32
    %77 = vector.shape_cast %76 : vector<1x128xi1> to vector<1x128xi1>
    %78 = vector.broadcast %77 : vector<1x128xi1> to vector<128x128xi1>
    %79 = vector.broadcast %cst_24 : f32 to vector<128x128xf32>
    %80 = arith.select %78, %74, %79 : vector<128x128xi1>, vector<128x128xf32>
    %81 = arith.addf %73, %80 : vector<128x128xf32>
    %c64_i32 = arith.constant 64 : i32
    %82 = tpu.dynamic_rotate %81 by %c64_i32 dim 1 : vector<128x128xf32>, i32 -> vector<128x128xf32>
    %c64_i32_25 = arith.constant 64 : i32
    %83 = vector.broadcast %c64_i32_25 : i32 to vector<1x128xi32>
    %84 = arith.cmpi sge, %33, %83 : vector<1x128xi32>
    %cst_26 = arith.constant 0.000000e+00 : f32
    %85 = vector.shape_cast %84 : vector<1x128xi1> to vector<1x128xi1>
    %86 = vector.broadcast %85 : vector<1x128xi1> to vector<128x128xi1>
    %87 = vector.broadcast %cst_26 : f32 to vector<128x128xf32>
    %88 = arith.select %86, %82, %87 : vector<128x128xi1>, vector<128x128xf32>
    %89 = arith.addf %81, %88 : vector<128x128xf32>
    %90 = arith.subf %89, %32 : vector<128x128xf32>
    %91 = vector.extract_strided_slice %89 {offsets = [0, 127], sizes = [128, 1], strides = [1, 1]} : vector<128x128xf32> to vector<128x1xf32>
    %cst_27 = arith.constant 0.000000e+00 : f32
    %92 = vector.broadcast %cst_27 : f32 to vector<128x128xf32>
    %93 = arith.cmpf oeq, %90, %92 : vector<128x128xf32>
    %cst_28 = arith.constant 0.000000e+00 : f32
    %94 = vector.broadcast %cst_28 : f32 to vector<128x128xf32>
    %95 = arith.select %93, %32, %94 : vector<128x128xi1>, vector<128x128xf32>
    %cst_29 = arith.constant 0.000000e+00 : f32
    %96 = vector.broadcast %cst_29 : f32 to vector<128x1xf32>
    %97 = arith.cmpf ogt, %91, %96 : vector<128x1xf32>
    %c0_i32 = arith.constant 0 : i32
    %98 = vector.broadcast %c0_i32 : i32 to vector<1x128xi32>
    %99 = arith.cmpi eq, %33, %98 : vector<1x128xi32>
    %cst_30 = arith.constant 1.000000e+00 : f32
    %cst_31 = arith.constant 0.000000e+00 : f32
    %100 = vector.broadcast %cst_30 : f32 to vector<1x128xf32>
    %101 = vector.broadcast %cst_31 : f32 to vector<1x128xf32>
    %102 = arith.select %99, %100, %101 : vector<1x128xi1>, vector<1x128xf32>
    %103 = vector.shape_cast %97 : vector<128x1xi1> to vector<128x1xi1>
    %104 = vector.broadcast %103 : vector<128x1xi1> to vector<128x128xi1>
    %105 = vector.shape_cast %102 : vector<1x128xf32> to vector<1x128xf32>
    %106 = vector.broadcast %105 : vector<1x128xf32> to vector<128x128xf32>
    %107 = arith.select %104, %95, %106 : vector<128x128xi1>, vector<128x128xf32>
    %108 = arith.truncf %107 : vector<128x128xf32> to vector<128x128xbf16>
    %109 = arith.truncf %32 : vector<128x128xf32> to vector<128x128xbf16>
    %110 = arith.truncf %5 : vector<8x128xf32> to vector<8x128xbf16>
    %111 = arith.extf %110 : vector<8x128xbf16> to vector<8x128xf32>
    %112 = arith.subf %5, %111 : vector<8x128xf32>
    %113 = arith.truncf %112 : vector<8x128xf32> to vector<8x128xbf16>
    %c0_i32_32 = arith.constant 0 : i32
    %c4_i32_33 = arith.constant 4 : i32
    %114 = arith.muli %c0_i32_32, %c4_i32_33 : i32
    %c0_i32_34 = arith.constant 0 : i32
    %115 = arith.addi %114, %c0_i32_34 : i32
    %116 = arith.sitofp %115 : i32 to f32
    %117 = vector.broadcast %116 : f32 to vector<128x128xf32>
    %118 = arith.cmpf oeq, %90, %117 : vector<128x128xf32>
    %cst_35 = arith.constant 0.000000e+00 : f32
    %119 = arith.truncf %cst_35 : f32 to bf16
    %120 = vector.broadcast %119 : bf16 to vector<128x128xbf16>
    %121 = arith.select %118, %109, %120 : vector<128x128xi1>, vector<128x128xbf16>
    %122 = vector.broadcast %116 : f32 to vector<128x1xf32>
    %123 = arith.cmpf ogt, %91, %122 : vector<128x1xf32>
    %124 = vector.shape_cast %123 : vector<128x1xi1> to vector<128x1xi1>
    %125 = vector.broadcast %124 : vector<128x1xi1> to vector<128x128xi1>
    %126 = arith.select %125, %121, %108 : vector<128x128xi1>, vector<128x128xbf16>
    %c1_i32_36 = arith.constant 1 : i32
    %127 = arith.addi %114, %c1_i32_36 : i32
    %128 = arith.sitofp %127 : i32 to f32
    %129 = vector.broadcast %128 : f32 to vector<128x128xf32>
    %130 = arith.cmpf oeq, %90, %129 : vector<128x128xf32>
    %cst_37 = arith.constant 0.000000e+00 : f32
    %131 = arith.truncf %cst_37 : f32 to bf16
    %132 = vector.broadcast %131 : bf16 to vector<128x128xbf16>
    %133 = arith.select %130, %109, %132 : vector<128x128xi1>, vector<128x128xbf16>
    %134 = vector.broadcast %128 : f32 to vector<128x1xf32>
    %135 = arith.cmpf ogt, %91, %134 : vector<128x1xf32>
    %136 = vector.shape_cast %135 : vector<128x1xi1> to vector<128x1xi1>
    %137 = vector.broadcast %136 : vector<128x1xi1> to vector<128x128xi1>
    %138 = arith.select %137, %133, %108 : vector<128x128xi1>, vector<128x128xbf16>
    %c2_i32_38 = arith.constant 2 : i32
    %139 = arith.addi %114, %c2_i32_38 : i32
    %140 = arith.sitofp %139 : i32 to f32
    %141 = vector.broadcast %140 : f32 to vector<128x128xf32>
    %142 = arith.cmpf oeq, %90, %141 : vector<128x128xf32>
    %cst_39 = arith.constant 0.000000e+00 : f32
    %143 = arith.truncf %cst_39 : f32 to bf16
    %144 = vector.broadcast %143 : bf16 to vector<128x128xbf16>
    %145 = arith.select %142, %109, %144 : vector<128x128xi1>, vector<128x128xbf16>
    %146 = vector.broadcast %140 : f32 to vector<128x1xf32>
    %147 = arith.cmpf ogt, %91, %146 : vector<128x1xf32>
    %148 = vector.shape_cast %147 : vector<128x1xi1> to vector<128x1xi1>
    %149 = vector.broadcast %148 : vector<128x1xi1> to vector<128x128xi1>
    %150 = arith.select %149, %145, %108 : vector<128x128xi1>, vector<128x128xbf16>
    %c3_i32 = arith.constant 3 : i32
    %151 = arith.addi %114, %c3_i32 : i32
    %152 = arith.sitofp %151 : i32 to f32
    %153 = vector.broadcast %152 : f32 to vector<128x128xf32>
    %154 = arith.cmpf oeq, %90, %153 : vector<128x128xf32>
    %cst_40 = arith.constant 0.000000e+00 : f32
    %155 = arith.truncf %cst_40 : f32 to bf16
    %156 = vector.broadcast %155 : bf16 to vector<128x128xbf16>
    %157 = arith.select %154, %109, %156 : vector<128x128xi1>, vector<128x128xbf16>
    %158 = vector.broadcast %152 : f32 to vector<128x1xf32>
    %159 = arith.cmpf ogt, %91, %158 : vector<128x1xf32>
    %160 = vector.shape_cast %159 : vector<128x1xi1> to vector<128x1xi1>
    %161 = vector.broadcast %160 : vector<128x1xi1> to vector<128x128xi1>
    %162 = arith.select %161, %157, %108 : vector<128x128xi1>, vector<128x128xbf16>
    %163 = tpu.concatenate %126, %138, %150, %162 in 0 : vector<128x128xbf16>, vector<128x128xbf16>, vector<128x128xbf16>, vector<128x128xbf16> -> vector<512x128xbf16>
    %cst_41 = arith.constant dense<0.000000e+00> : vector<8x512xf32>
    %164 = tpu.matmul %110, %163, %cst_41 {dimension_numbers = #tpu.dot_dimension_numbers<[1], [1], [0], [0], [0, 0, 1, 0], [], []>} : vector<8x128xbf16>, vector<512x128xbf16>, vector<8x512xf32> -> vector<8x512xf32>
    %cst_42 = arith.constant dense<0.000000e+00> : vector<8x512xf32>
    %165 = tpu.matmul %113, %163, %cst_42 {dimension_numbers = #tpu.dot_dimension_numbers<[1], [1], [0], [0], [0, 0, 1, 0], [], []>} : vector<8x128xbf16>, vector<512x128xbf16>, vector<8x512xf32> -> vector<8x512xf32>
    %166 = arith.addf %164, %165 : vector<8x512xf32>
    %167 = vector.extract_strided_slice %166 {offsets = [0, 0], sizes = [8, 128], strides = [1, 1]} : vector<8x512xf32> to vector<8x128xf32>
    %168 = arith.subf %167, %7 : vector<8x128xf32>
    %c0_i32_43 = arith.constant 0 : i32
    %169 = arith.addi %114, %c0_i32_43 : i32
    %c8_i32_44 = arith.constant 8 : i32
    %170 = arith.muli %169, %c8_i32_44 : i32
    %171 = tpu.assume_multiple %170, 8 : i32
    %c0_45 = arith.constant 0 : index
    %172 = arith.index_cast %171 : i32 to index
    %c0_46 = arith.constant 0 : index
    %173 = vector.load %arg6[%c0_45, %172, %c0_46] : memref<1x32x128xf32, #tpu.memory_space<vmem>>, vector<1x8x128xf32>
    %174 = vector.shape_cast %173 : vector<1x8x128xf32> to vector<8x128xf32>
    %175 = vector.shape_cast %168 : vector<8x128xf32> to vector<1x8x128xf32>
    tpu.vector_store %arg6[%c0_45, %172, %c0_46], %175 {strides = array<i32>} : memref<1x32x128xf32, #tpu.memory_space<vmem>>, vector<1x8x128xf32>,
    %176 = vector.extract_strided_slice %166 {offsets = [0, 128], sizes = [8, 128], strides = [1, 1]} : vector<8x512xf32> to vector<8x128xf32>
    %177 = arith.subf %176, %7 : vector<8x128xf32>
    %c1_i32_47 = arith.constant 1 : i32
    %178 = arith.addi %114, %c1_i32_47 : i32
    %c8_i32_48 = arith.constant 8 : i32
    %179 = arith.muli %178, %c8_i32_48 : i32
    %180 = tpu.assume_multiple %179, 8 : i32
    %c0_49 = arith.constant 0 : index
    %181 = arith.index_cast %180 : i32 to index
    %c0_50 = arith.constant 0 : index
    %182 = vector.load %arg6[%c0_49, %181, %c0_50] : memref<1x32x128xf32, #tpu.memory_space<vmem>>, vector<1x8x128xf32>
    %183 = vector.shape_cast %182 : vector<1x8x128xf32> to vector<8x128xf32>
    %184 = vector.shape_cast %177 : vector<8x128xf32> to vector<1x8x128xf32>
    tpu.vector_store %arg6[%c0_49, %181, %c0_50], %184 {strides = array<i32>} : memref<1x32x128xf32, #tpu.memory_space<vmem>>, vector<1x8x128xf32>,
    %185 = vector.extract_strided_slice %166 {offsets = [0, 256], sizes = [8, 128], strides = [1, 1]} : vector<8x512xf32> to vector<8x128xf32>
    %186 = arith.subf %185, %7 : vector<8x128xf32>
    %c2_i32_51 = arith.constant 2 : i32
    %187 = arith.addi %114, %c2_i32_51 : i32
    %c8_i32_52 = arith.constant 8 : i32
    %188 = arith.muli %187, %c8_i32_52 : i32
    %189 = tpu.assume_multiple %188, 8 : i32
    %c0_53 = arith.constant 0 : index
    %190 = arith.index_cast %189 : i32 to index
    %c0_54 = arith.constant 0 : index
    %191 = vector.load %arg6[%c0_53, %190, %c0_54] : memref<1x32x128xf32, #tpu.memory_space<vmem>>, vector<1x8x128xf32>
    %192 = vector.shape_cast %191 : vector<1x8x128xf32> to vector<8x128xf32>
    %193 = vector.shape_cast %186 : vector<8x128xf32> to vector<1x8x128xf32>
    tpu.vector_store %arg6[%c0_53, %190, %c0_54], %193 {strides = array<i32>} : memref<1x32x128xf32, #tpu.memory_space<vmem>>, vector<1x8x128xf32>,
    %194 = vector.extract_strided_slice %166 {offsets = [0, 384], sizes = [8, 128], strides = [1, 1]} : vector<8x512xf32> to vector<8x128xf32>
    %195 = arith.subf %194, %7 : vector<8x128xf32>
    %c3_i32_55 = arith.constant 3 : i32
    %196 = arith.addi %114, %c3_i32_55 : i32
    %c8_i32_56 = arith.constant 8 : i32
    %197 = arith.muli %196, %c8_i32_56 : i32
    %198 = tpu.assume_multiple %197, 8 : i32
    %c0_57 = arith.constant 0 : index
    %199 = arith.index_cast %198 : i32 to index
    %c0_58 = arith.constant 0 : index
    %200 = vector.load %arg6[%c0_57, %199, %c0_58] : memref<1x32x128xf32, #tpu.memory_space<vmem>>, vector<1x8x128xf32>
    %201 = vector.shape_cast %200 : vector<1x8x128xf32> to vector<8x128xf32>
    %202 = vector.shape_cast %195 : vector<8x128xf32> to vector<1x8x128xf32>
    tpu.vector_store %arg6[%c0_57, %199, %c0_58], %202 {strides = array<i32>} : memref<1x32x128xf32, #tpu.memory_space<vmem>>, vector<1x8x128xf32>,
    %c1_i32_59 = arith.constant 1 : i32
    return
  }
  func.func @transform_0(%arg0: i32, %arg1: i32) -> (i32, i32, i32) {
    %c0_i32 = arith.constant 0 : i32
    %c0_i32_0 = arith.constant 0 : i32
    return %arg0, %arg1, %c0_i32 : i32, i32, i32
  }
  func.func @transform_1(%arg0: i32, %arg1: i32) -> (i32, i32, i32) {
    %c0_i32 = arith.constant 0 : i32
    %c0_i32_0 = arith.constant 0 : i32
    %c0_i32_1 = arith.constant 0 : i32
    return %arg0, %c0_i32, %c0_i32_0 : i32, i32, i32
  }
  func.func @transform_2(%arg0: i32, %arg1: i32) -> (i32, i32, i32) {
    %c0_i32 = arith.constant 0 : i32
    %c0_i32_0 = arith.constant 0 : i32
    %c0_i32_1 = arith.constant 0 : i32
    return %arg0, %c0_i32, %c0_i32_0 : i32, i32, i32
  }
  func.func @transform_3(%arg0: i32, %arg1: i32) -> (i32, i32, i32) {
    %c0_i32 = arith.constant 0 : i32
    %c0_i32_0 = arith.constant 0 : i32
    return %arg0, %c0_i32, %arg1 : i32, i32, i32
  }
  func.func @transform_4(%arg0: i32, %arg1: i32) -> (i32, i32, i32) {
    %c0_i32 = arith.constant 0 : i32
    %c0_i32_0 = arith.constant 0 : i32
    return %arg0, %c0_i32, %arg1 : i32, i32, i32
  }
}

</mosaic_0001>

<llo_original>
// kernel: tpu_custom_call.1
$region0: #{tpu_custom_call.1}
  #allocation0 [shape = 'u32[]', space=smem, size = 0x4, offset = 0x4, fixed_abs, tag = 'smem constant byte address 0x4 - core index']
  #allocation1 [shape = 'u32[144,128]{1,0:T(1,128)}', space=vmem, size = 0x12000, scoped, tag = 'internal scratch']
  %s0 = inlined_call_operand.vmem [shape: f32[2,128,3], index: 0, kind: input, shape index: {}]
  %s1 = inlined_call_operand.vmem [shape: f32[2,3,128], index: 1, kind: input, shape index: {}]
  %s2 = inlined_call_operand.vmem [shape: f32[2,8,128], index: 2, kind: input, shape index: {}]
  %s3 = inlined_call_operand.vmem [shape: f32[2,8,128], index: 3, kind: input, shape index: {}]
  %s4 = inlined_call_operand.hbm [shape: f32[2,32,128], index: 4, kind: output, shape index: {}]
  %s5 = sld [smem:[#allocation0]]
  $region49: #{tpu_custom_call.1} parent=0
    _
  %s7 = ssub.s32 1, %s5
  %s8 = scalar_select 0, %s7, %s5
  $region1: #{tpu_custom_call.1} parent=0
    #allocation2 [shape = 'u8[32768]{0}', space=vmem, size = 0x8000, scoped, tag = 'output window, operand 0']
    #allocation3 [shape = 's32[2]{0}', space=sflag, size = 0x8, scoped, tag = 'scoped memory for tpu_custom_call.1']
    %9 = vsyncpa [#allocation3], 0
    %s10 = scalar_lea.sflag [#allocation3], 1
    %11 = vsyncpa %s10, 0
    loop: start=0, step=1, limit=4
    $region2: #{tpu_custom_call.1} parent=1 // loop_pre_header
      _
    $region3: #{tpu_custom_call.1} parent=1 // loop_header
      %s13 = sphi 0, %s17
      %p14 = scmp.ge.s32.totalorder %s13, 4
      %s20 = sphi 0, %s32
      %s21 = sphi 0, %s28
      %s22 = sphi 0, %s20
      %s23 = sphi 0, %s21
      %s24 = sphi 0, %s22
      %s25 = sphi 0, %s23
      %s37 = sphi 0, %s39
      %s40 = sphi 0, %s37
      %s41 = sphi 0, %s40
      %s57 = sphi 0, %s41
      %s63 = sphi 0, %s65
      %s66 = sphi 0, %s63
      %s67 = sphi 0, %s66
      %s83 = sphi 0, %s67
      %s89 = sphi 0, %s91
      %s92 = sphi 0, %s89
      %s93 = sphi 0, %s92
      %s109 = sphi 0, %s93
      %s117 = sphi 0, %s119
      %s120 = sphi 0, %s117
      %s121 = sphi 0, %s120
      %s137 = sphi 0, %s121
      %s145 = sphi 0, %s147
      %s148 = sphi 0, %s145
      %s149 = sphi 0, %s148
      %s165 = sphi 0, %s149
    $region4: #{tpu_custom_call.1} parent=1 // loop_header_branch
      %16 = sbr.rel (%p14) target = $region8
    $region5: #{tpu_custom_call.1} parent=1 // loop_body
      %s18 = ssub.s32 %s13, 1
      %s19 = ssub.s32 %s13, 2
      %s26 = sadd.s32 1, %s21
      %p27 = scmp.ge.s32.totalorder %s26, 1
      %s28 = scalar_select %p27, 0, %s26
      %s29 = sadd.s32 1, %s20
      %s30 = scalar_select %p27, %s29, %s20
      %p31 = scmp.ge.s32.totalorder %s30, 2
      %s32 = scalar_select %p31, 0, %s30
      %s33 = ssub.s32 %s20, %s32
      %s34 = ssub.s32 %s21, %s28
      %s35 = sor.u32 %s33, %s34
      %p36 = scmp.eq.s32.totalorder %s35, 0
      %s38 = sadd.s32 %s37, 1
      %s39 = scalar_select %p36, %s37, %s38
      %p42 = pneg %p36
      %p43 = scmp.eq.s32.totalorder %s13, 1
      %p44 = por %p42, %p43
      %p45 = scmp.ne.s32.totalorder %s37, %s40
      %p46 = scmp.eq.s32.totalorder %s13, 0
      %p47 = por %p45, %p46
      %p48 = scmp.ne.s32.totalorder %s37, %s40
      %p49 = scmp.eq.s32.totalorder %s18, 1
      %p50 = por %p48, %p49
      %p51 = scmp.ne.s32.totalorder %s40, %s41
      %p52 = scmp.eq.s32.totalorder %s18, 0
      %p53 = por %p51, %p52
      %p54 = scmp.ne.s32.totalorder %s40, %s41
      %p55 = scmp.eq.s32.totalorder %s19, 1
      %p56 = por %p54, %p55
      %p58 = scmp.ne.s32.totalorder %s41, %s57
      %p59 = scmp.eq.s32.totalorder %s19, 0
      %p60 = por %p58, %p59
      %s61 = ssub.s32 %s20, %s32
      %p62 = scmp.eq.s32.totalorder %s61, 0
      %s64 = sadd.s32 %s63, 1
      %s65 = scalar_select %p62, %s63, %s64
      %p68 = pneg %p62
      %p69 = scmp.eq.s32.totalorder %s13, 1
      %p70 = por %p68, %p69
      %p71 = scmp.ne.s32.totalorder %s63, %s66
      %p72 = scmp.eq.s32.totalorder %s13, 0
      %p73 = por %p71, %p72
      %p74 = scmp.ne.s32.totalorder %s63, %s66
      %p75 = scmp.eq.s32.totalorder %s18, 1
      %p76 = por %p74, %p75
      %p77 = scmp.ne.s32.totalorder %s66, %s67
      %p78 = scmp.eq.s32.totalorder %s18, 0
      %p79 = por %p77, %p78
      %p80 = scmp.ne.s32.totalorder %s66, %s67
      %p81 = scmp.eq.s32.totalorder %s19, 1
      %p82 = por %p80, %p81
      %p84 = scmp.ne.s32.totalorder %s67, %s83
      %p85 = scmp.eq.s32.totalorder %s19, 0
      %p86 = por %p84, %p85
      %s87 = ssub.s32 %s20, %s32
      %p88 = scmp.eq.s32.totalorder %s87, 0
      %s90 = sadd.s32 %s89, 1
      %s91 = scalar_select %p88, %s89, %s90
      %p94 = pneg %p88
      %p95 = scmp.eq.s32.totalorder %s13, 1
      %p96 = por %p94, %p95
      %p97 = scmp.ne.s32.totalorder %s89, %s92
      %p98 = scmp.eq.s32.totalorder %s13, 0
      %p99 = por %p97, %p98
      %p100 = scmp.ne.s32.totalorder %s89, %s92
      %p101 = scmp.eq.s32.totalorder %s18, 1
      %p102 = por %p100, %p101
      %p103 = scmp.ne.s32.totalorder %s92, %s93
      %p104 = scmp.eq.s32.totalorder %s18, 0
      %p105 = por %p103, %p104
      %p106 = scmp.ne.s32.totalorder %s92, %s93
      %p107 = scmp.eq.s32.totalorder %s19, 1
      %p108 = por %p106, %p107
      %p110 = scmp.ne.s32.totalorder %s93, %s109
      %p111 = scmp.eq.s32.totalorder %s19, 0
      %p112 = por %p110, %p111
      %s113 = ssub.s32 %s20, %s32
      %s114 = ssub.s32 %s21, %s28
      %s115 = sor.u32 %s113, %s114
      %p116 = scmp.eq.s32.totalorder %s115, 0
      %s118 = sadd.s32 %s117, 1
      %s119 = scalar_select %p116, %s117, %s118
      %p122 = pneg %p116
      %p123 = scmp.eq.s32.totalorder %s13, 1
      %p124 = por %p122, %p123
      %p125 = scmp.ne.s32.totalorder %s117, %s120
      %p126 = scmp.eq.s32.totalorder %s13, 0
      %p127 = por %p125, %p126
      %p128 = scmp.ne.s32.totalorder %s117, %s120
      %p129 = scmp.eq.s32.totalorder %s18, 1
      %p130 = por %p128, %p129
      %p131 = scmp.ne.s32.totalorder %s120, %s121
      %p132 = scmp.eq.s32.totalorder %s18, 0
      %p133 = por %p131, %p132
      %p134 = scmp.ne.s32.totalorder %s120, %s121
      %p135 = scmp.eq.s32.totalorder %s19, 1
      %p136 = por %p134, %p135
      %p138 = scmp.ne.s32.totalorder %s121, %s137
      %p139 = scmp.eq.s32.totalorder %s19, 0
      %p140 = por %p138, %p139
      %s141 = ssub.s32 %s20, %s32
      %s142 = ssub.s32 %s21, %s28
      %s143 = sor.u32 %s141, %s142
      %p144 = scmp.eq.s32.totalorder %s143, 0
      %s146 = sadd.s32 %s145, 1
      %s147 = scalar_select %p144, %s145, %s146
      %p150 = pneg %p144
      %p151 = scmp.eq.s32.totalorder %s13, 1
      %p152 = por %p150, %p151
      %p153 = scmp.ne.s32.totalorder %s145, %s148
      %p154 = scmp.eq.s32.totalorder %s13, 0
      %p155 = por %p153, %p154
      %p156 = scmp.ne.s32.totalorder %s145, %s148
      %p157 = scmp.eq.s32.totalorder %s18, 1
      %p158 = por %p156, %p157
      %p159 = scmp.ne.s32.totalorder %s148, %s149
      %p160 = scmp.eq.s32.totalorder %s18, 0
      %p161 = por %p159, %p160
      %p162 = scmp.ne.s32.totalorder %s148, %s149
      %p163 = scmp.eq.s32.totalorder %s19, 1
      %p164 = por %p162, %p163
      %p166 = scmp.ne.s32.totalorder %s149, %s165
      %p167 = scmp.eq.s32.totalorder %s19, 0
      %p168 = por %p166, %p167
      %p169 = scmp.le.s32.totalorder 1, %s13
      %p170 = scmp.lt.s32.totalorder %s13, 3
      %p171 = pnand %p169, %p170
      %p172 = pneg %p171
      // Predicated region
      $region9: #{tpu_custom_call.1} parent=5 // pred_check
        _
      $region10: #{tpu_custom_call.1} parent=5 // pred_check_branch
        %174 = sbr.rel (%p171) target = $region12
      $region11: #{tpu_custom_call.1} parent=5 // pred_region
        %s175 = ssub.s32 %s13, 1
      $region12: #{tpu_custom_call.1} parent=5 // pred_fallthru
        _
      %p176 = scmp.lt.s32.totalorder %s13, 2
      // Predicated region
      $region13: #{tpu_custom_call.1} parent=5 // pred_check
        %p177 = pneg %p176
      $region14: #{tpu_custom_call.1} parent=5 // pred_check_branch
        %179 = sbr.rel (%p177) target = $region16
      $region15: #{tpu_custom_call.1} parent=5 // pred_region
        // Predicated region
        $region17: #{tpu_custom_call.1} parent=15 // pred_check
          %p180 = pneg %p47
        $region18: #{tpu_custom_call.1} parent=15 // pred_check_branch
          %182 = sbr.rel (%p180) target = $region20
        $region19: #{tpu_custom_call.1} parent=15 // pred_region
          %s183 = smul.u32 16, %s21
          %p184 = scmp.lt.s32.totalorder %s20, 1
          %s185 = scalar_select %p184, %s20, 1
          %p186 = scmp.lt.s32.totalorder %s183, 15
          %s187 = scalar_select %p186, %s183, 15
          %s188 = smul.addr %s185, 16
          %s189 = sadd.s32 %s187, %s188
          %s190 = smul.addr %s189, 8
          %s191 = scalar_lea.vmem %s0, %s190
          %s192 = smul.u32 16, %s21
        $region20: #{tpu_custom_call.1} parent=15 // pred_fallthru
          _
        // Predicated region
        $region21: #{tpu_custom_call.1} parent=15 // pred_check
          %p193 = pneg %p73
        $region22: #{tpu_custom_call.1} parent=15 // pred_check_branch
          %195 = sbr.rel (%p193) target = $region24
        $region23: #{tpu_custom_call.1} parent=15 // pred_region
          %p196 = scmp.lt.s32.totalorder %s20, 1
          %s197 = scalar_select %p196, %s20, 1
          %s198 = smul.addr %s197, 4
          %s199 = scalar_lea.vmem %s1, %s198
        $region24: #{tpu_custom_call.1} parent=15 // pred_fallthru
          _
        // Predicated region
        $region25: #{tpu_custom_call.1} parent=15 // pred_check
          %p200 = pneg %p99
        $region26: #{tpu_custom_call.1} parent=15 // pred_check_branch
          %202 = sbr.rel (%p200) target = $region28
        $region27: #{tpu_custom_call.1} parent=15 // pred_region
          %p203 = scmp.lt.s32.totalorder %s20, 1
          %s204 = scalar_select %p203, %s20, 1
          %s205 = smul.addr %s204, 8
          %s206 = scalar_lea.vmem %s2, %s205
        $region28: #{tpu_custom_call.1} parent=15 // pred_fallthru
          _
        // Predicated region
        $region29: #{tpu_custom_call.1} parent=15 // pred_check
          %p207 = pneg %p127
        $region30: #{tpu_custom_call.1} parent=15 // pred_check_branch
          %209 = sbr.rel (%p207) target = $region32
        $region31: #{tpu_custom_call.1} parent=15 // pred_region
          %p210 = scmp.lt.s32.totalorder %s20, 1
          %s211 = scalar_select %p210, %s20, 1
          %p212 = scmp.lt.s32.totalorder %s21, 0
          %s213 = scalar_select %p212, %s21, 0
          %s214 = sadd.s32 %s213, %s211
          %s215 = smul.addr %s214, 8
          %s216 = scalar_lea.vmem %s3, %s215
        $region32: #{tpu_custom_call.1} parent=15 // pred_fallthru
          _
      $region16: #{tpu_custom_call.1} parent=5 // pred_fallthru
        _
      %p217 = scmp.le.s32.totalorder 1, %s13
      %p218 = scmp.lt.s32.totalorder %s13, 3
      %p219 = pnand %p217, %p218
      %p220 = pneg %p219
      // Predicated region
      $region33: #{tpu_custom_call.1} parent=5 // pred_check
        _
      $region34: #{tpu_custom_call.1} parent=5 // pred_check_branch
        %222 = sbr.rel (%p219) target = $region36
      $region35: #{tpu_custom_call.1} parent=5 // pred_region
        %s223 = ssub.s32 %s13, 1
        %s224 = smul.u32 16, %s23
        %p225 = scmp.lt.s32.totalorder %s22, 1
        %s226 = scalar_select %p225, %s22, 1
        %p227 = scmp.lt.s32.totalorder %s224, 15
        %s228 = scalar_select %p227, %s224, 15
        %s229 = smul.addr %s226, 16
        %s230 = sadd.s32 %s228, %s229
        %s231 = smul.addr %s230, 8
        %s232 = scalar_lea.vmem %s0, %s231
        %p233 = pneg %p53
        %p234 = pneg %p50
        %p235 = scmp.lt.s32.totalorder %s22, 1
        %s236 = scalar_select %p235, %s22, 1
        %s237 = smul.addr %s236, 4
        %s238 = scalar_lea.vmem %s1, %s237
        %p239 = pneg %p79
        %p240 = pneg %p76
        %p241 = scmp.lt.s32.totalorder %s22, 1
        %s242 = scalar_select %p241, %s22, 1
        %s243 = smul.addr %s242, 8
        %s244 = scalar_lea.vmem %s2, %s243
        %p245 = pneg %p105
        %p246 = pneg %p102
        %p247 = scmp.lt.s32.totalorder %s22, 1
        %s248 = scalar_select %p247, %s22, 1
        %p249 = scmp.lt.s32.totalorder %s23, 0
        %s250 = scalar_select %p249, %s23, 0
        %s251 = sadd.s32 %s250, %s248
        %s252 = smul.addr %s251, 8
        %s253 = scalar_lea.vmem %s3, %s252
        %p254 = pneg %p133
        %p255 = pneg %p130
        %p256 = pneg %p161
        %p257 = pneg %p158
        %s258 = sand.u32 %s148, 1
        %s259 = scalar_lea.sflag [#allocation3], %s258
        %s260 = sand.u32 %s148, 1
        %s261 = smul.addr %s260, 32
        %s262 = scalar_lea.vmem [#allocation2], %s261
        %s263 = smul.u32 16, %s23
        %p264 = scmp.lt.s32.totalorder %s22, 1
        %s265 = scalar_select %p264, %s22, 1
        %p266 = scmp.lt.s32.totalorder %s263, 15
        %s267 = scalar_select %p266, %s263, 15
        %s268 = smul.addr %s265, 16
        %s269 = sadd.s32 %s267, %s268
        %s270 = smul.addr %s269, 8
        %s271 = scalar_lea.vmem %s0, %s270
        %s272 = smul.u32 16, %s23
        %p273 = scmp.lt.s32.totalorder %s22, 1
        %s274 = scalar_select %p273, %s22, 1
        %s275 = smul.addr %s274, 4
        %s276 = scalar_lea.vmem %s1, %s275
        %p277 = scmp.lt.s32.totalorder %s22, 1
        %s278 = scalar_select %p277, %s22, 1
        %s279 = smul.addr %s278, 8
        %s280 = scalar_lea.vmem %s2, %s279
        %p281 = scmp.lt.s32.totalorder %s22, 1
        %s282 = scalar_select %p281, %s22, 1
        %p283 = scmp.lt.s32.totalorder %s23, 0
        %s284 = scalar_select %p283, %s23, 0
        %s285 = sadd.s32 %s284, %s282
        %s286 = smul.addr %s285, 8
        %s287 = scalar_lea.vmem %s3, %s286
        %v291 = vld [vmem:[%s276] sm:$0x7]
        %v292 = vld [vmem:[%s271] sm:$0xff]
        %v293 = vld [vmem:[%s271 + $0x8] sm:$0xff]
        %v294 = vld [vmem:[%s271 + $0x10] sm:$0xff]
        %v295 = vld [vmem:[%s271 + $0x18] sm:$0xff]
        %v296 = vld [vmem:[%s271 + $0x20] sm:$0xff]
        %v297 = vld [vmem:[%s271 + $0x28] sm:$0xff]
        %v298 = vld [vmem:[%s271 + $0x30] sm:$0xff]
        %v299 = vld [vmem:[%s271 + $0x38] sm:$0xff]
        %v300 = vld [vmem:[%s271 + $0x40] sm:$0xff]
        %v301 = vld [vmem:[%s271 + $0x48] sm:$0xff]
        %v302 = vld [vmem:[%s271 + $0x50] sm:$0xff]
        %v303 = vld [vmem:[%s271 + $0x58] sm:$0xff]
        %v304 = vld [vmem:[%s271 + $0x60] sm:$0xff]
        %v305 = vld [vmem:[%s271 + $0x68] sm:$0xff]
        %v306 = vld [vmem:[%s271 + $0x70] sm:$0xff]
        %v307 = vld [vmem:[%s271 + $0x78] sm:$0xff]
        %v308 = vld [vmem:[%s280] sm:$0xff]
        %v309 = vld [vmem:[%s287] sm:$0xff]
        %311 = vset.pattern.permute.xlu0 0
        %312 = vperm.xlu0 %311, %v292
        %v313 = vpop.permute.xlu0 %312
        %316 = vset.pattern.permute.xlu0 0
        %317 = vperm.xlu0 %316, %v293
        %v318 = vpop.permute.xlu0 %317
        %321 = vset.pattern.permute.xlu0 0
        %322 = vperm.xlu0 %321, %v294
        %v323 = vpop.permute.xlu0 %322
        %326 = vset.pattern.permute.xlu0 0
        %327 = vperm.xlu0 %326, %v295
        %v328 = vpop.permute.xlu0 %327
        %331 = vset.pattern.permute.xlu0 0
        %332 = vperm.xlu0 %331, %v296
        %v333 = vpop.permute.xlu0 %332
        %336 = vset.pattern.permute.xlu0 0
        %337 = vperm.xlu0 %336, %v297
        %v338 = vpop.permute.xlu0 %337
        %341 = vset.pattern.permute.xlu0 0
        %342 = vperm.xlu0 %341, %v298
        %v343 = vpop.permute.xlu0 %342
        %346 = vset.pattern.permute.xlu0 0
        %347 = vperm.xlu0 %346, %v299
        %v348 = vpop.permute.xlu0 %347
        %351 = vset.pattern.permute.xlu0 0
        %352 = vperm.xlu0 %351, %v300
        %v353 = vpop.permute.xlu0 %352
        %356 = vset.pattern.permute.xlu0 0
        %357 = vperm.xlu0 %356, %v301
        %v358 = vpop.permute.xlu0 %357
        %361 = vset.pattern.permute.xlu0 0
        %362 = vperm.xlu0 %361, %v302
        %v363 = vpop.permute.xlu0 %362
        %366 = vset.pattern.permute.xlu0 0
        %367 = vperm.xlu0 %366, %v303
        %v368 = vpop.permute.xlu0 %367
        %371 = vset.pattern.permute.xlu0 0
        %372 = vperm.xlu0 %371, %v304
        %v373 = vpop.permute.xlu0 %372
        %376 = vset.pattern.permute.xlu0 0
        %377 = vperm.xlu0 %376, %v305
        %v378 = vpop.permute.xlu0 %377
        %381 = vset.pattern.permute.xlu0 0
        %382 = vperm.xlu0 %381, %v306
        %v383 = vpop.permute.xlu0 %382
        %386 = vset.pattern.permute.xlu0 0
        %387 = vperm.xlu0 %386, %v307
        %v388 = vpop.permute.xlu0 %387
        %v390 = vlaneseq
        %v391 = vshrl.u32 %v390, 7
        %v392 = vsub.s32 0, %v391
        %v393 = vrot.slane %v291, %v392
        %v394 = vsub.f32 %v313, %v393
        %v395 = vsub.f32 %v318, %v393
        %v396 = vsub.f32 %v323, %v393
        %v397 = vsub.f32 %v328, %v393
        %v398 = vsub.f32 %v333, %v393
        %v399 = vsub.f32 %v338, %v393
        %v400 = vsub.f32 %v343, %v393
        %v401 = vsub.f32 %v348, %v393
        %v402 = vsub.f32 %v353, %v393
        %v403 = vsub.f32 %v358, %v393
        %v404 = vsub.f32 %v363, %v393
        %v405 = vsub.f32 %v368, %v393
        %v406 = vsub.f32 %v373, %v393
        %v407 = vsub.f32 %v378, %v393
        %v408 = vsub.f32 %v383, %v393
        %v409 = vsub.f32 %v388, %v393
        %v410 = vmul.f32 %v394, %v394
        %v411 = vmul.f32 %v395, %v395
        %v412 = vmul.f32 %v396, %v396
        %v413 = vmul.f32 %v397, %v397
        %v414 = vmul.f32 %v398, %v398
        %v415 = vmul.f32 %v399, %v399
        %v416 = vmul.f32 %v400, %v400
        %v417 = vmul.f32 %v401, %v401
        %v418 = vmul.f32 %v402, %v402
        %v419 = vmul.f32 %v403, %v403
        %v420 = vmul.f32 %v404, %v404
        %v421 = vmul.f32 %v405, %v405
        %v422 = vmul.f32 %v406, %v406
        %v423 = vmul.f32 %v407, %v407
        %v424 = vmul.f32 %v408, %v408
        %v425 = vmul.f32 %v409, %v409
        %426 = vset.pattern.permute.xlu0 1
        %427 = vperm.xlu0 %426, %v292
        %v428 = vpop.permute.xlu0 %427
        %430 = vset.pattern.permute.xlu0 1
        %431 = vperm.xlu0 %430, %v293
        %v432 = vpop.permute.xlu0 %431
        %434 = vset.pattern.permute.xlu0 1
        %435 = vperm.xlu0 %434, %v294
        %v436 = vpop.permute.xlu0 %435
        %438 = vset.pattern.permute.xlu0 1
        %439 = vperm.xlu0 %438, %v295
        %v440 = vpop.permute.xlu0 %439
        %442 = vset.pattern.permute.xlu0 1
        %443 = vperm.xlu0 %442, %v296
        %v444 = vpop.permute.xlu0 %443
        %446 = vset.pattern.permute.xlu0 1
        %447 = vperm.xlu0 %446, %v297
        %v448 = vpop.permute.xlu0 %447
        %450 = vset.pattern.permute.xlu0 1
        %451 = vperm.xlu0 %450, %v298
        %v452 = vpop.permute.xlu0 %451
        %454 = vset.pattern.permute.xlu0 1
        %455 = vperm.xlu0 %454, %v299
        %v456 = vpop.permute.xlu0 %455
        %458 = vset.pattern.permute.xlu0 1
        %459 = vperm.xlu0 %458, %v300
        %v460 = vpop.permute.xlu0 %459
        %462 = vset.pattern.permute.xlu0 1
        %463 = vperm.xlu0 %462, %v301
        %v464 = vpop.permute.xlu0 %463
        %466 = vset.pattern.permute.xlu0 1
        %467 = vperm.xlu0 %466, %v302
        %v468 = vpop.permute.xlu0 %467
        %470 = vset.pattern.permute.xlu0 1
        %471 = vperm.xlu0 %470, %v303
        %v472 = vpop.permute.xlu0 %471
        %474 = vset.pattern.permute.xlu0 1
        %475 = vperm.xlu0 %474, %v304
        %v476 = vpop.permute.xlu0 %475
        %478 = vset.pattern.permute.xlu0 1
        %479 = vperm.xlu0 %478, %v305
        %v480 = vpop.permute.xlu0 %479
        %482 = vset.pattern.permute.xlu0 1
        %483 = vperm.xlu0 %482, %v306
        %v484 = vpop.permute.xlu0 %483
        %486 = vset.pattern.permute.xlu0 1
        %487 = vperm.xlu0 %486, %v307
        %v488 = vpop.permute.xlu0 %487
        %v490 = vlaneseq
        %v491 = vshrl.u32 %v490, 7
        %v492 = vsub.s32 1, %v491
        %v493 = vrot.slane %v291, %v492
        %v494 = vsub.f32 %v428, %v493
        %v495 = vsub.f32 %v432, %v493
        %v496 = vsub.f32 %v436, %v493
        %v497 = vsub.f32 %v440, %v493
        %v498 = vsub.f32 %v444, %v493
        %v499 = vsub.f32 %v448, %v493
        %v500 = vsub.f32 %v452, %v493
        %v501 = vsub.f32 %v456, %v493
        %v502 = vsub.f32 %v460, %v493
        %v503 = vsub.f32 %v464, %v493
        %v504 = vsub.f32 %v468, %v493
        %v505 = vsub.f32 %v472, %v493
        %v506 = vsub.f32 %v476, %v493
        %v507 = vsub.f32 %v480, %v493
        %v508 = vsub.f32 %v484, %v493
        %v509 = vsub.f32 %v488, %v493
        %v510 = vmul.f32 %v494, %v494
        %v511 = vmul.f32 %v495, %v495
        %v512 = vmul.f32 %v496, %v496
        %v513 = vmul.f32 %v497, %v497
        %v514 = vmul.f32 %v498, %v498
        %v515 = vmul.f32 %v499, %v499
        %v516 = vmul.f32 %v500, %v500
        %v517 = vmul.f32 %v501, %v501
        %v518 = vmul.f32 %v502, %v502
        %v519 = vmul.f32 %v503, %v503
        %v520 = vmul.f32 %v504, %v504
        %v521 = vmul.f32 %v505, %v505
        %v522 = vmul.f32 %v506, %v506
        %v523 = vmul.f32 %v507, %v507
        %v524 = vmul.f32 %v508, %v508
        %v525 = vmul.f32 %v509, %v509
        %v526 = vadd.f32 %v410, %v510
        %v527 = vadd.f32 %v411, %v511
        %v528 = vadd.f32 %v412, %v512
        %v529 = vadd.f32 %v413, %v513
        %v530 = vadd.f32 %v414, %v514
        %v531 = vadd.f32 %v415, %v515
        %v532 = vadd.f32 %v416, %v516
        %v533 = vadd.f32 %v417, %v517
        %v534 = vadd.f32 %v418, %v518
        %v535 = vadd.f32 %v419, %v519
        %v536 = vadd.f32 %v420, %v520
        %v537 = vadd.f32 %v421, %v521
        %v538 = vadd.f32 %v422, %v522
        %v539 = vadd.f32 %v423, %v523
        %v540 = vadd.f32 %v424, %v524
        %v541 = vadd.f32 %v425, %v525
        %542 = vset.pattern.permute.xlu0 2
        %543 = vperm.xlu0 %542, %v292
        %v544 = vpop.permute.xlu0 %543
        %546 = vset.pattern.permute.xlu0 2
        %547 = vperm.xlu0 %546, %v293
        %v548 = vpop.permute.xlu0 %547
        %550 = vset.pattern.permute.xlu0 2
        %551 = vperm.xlu0 %550, %v294
        %v552 = vpop.permute.xlu0 %551
        %554 = vset.pattern.permute.xlu0 2
        %555 = vperm.xlu0 %554, %v295
        %v556 = vpop.permute.xlu0 %555
        %558 = vset.pattern.permute.xlu0 2
        %559 = vperm.xlu0 %558, %v296
        %v560 = vpop.permute.xlu0 %559
        %562 = vset.pattern.permute.xlu0 2
        %563 = vperm.xlu0 %562, %v297
        %v564 = vpop.permute.xlu0 %563
        %566 = vset.pattern.permute.xlu0 2
        %567 = vperm.xlu0 %566, %v298
        %v568 = vpop.permute.xlu0 %567
        %570 = vset.pattern.permute.xlu0 2
        %571 = vperm.xlu0 %570, %v299
        %v572 = vpop.permute.xlu0 %571
        %574 = vset.pattern.permute.xlu0 2
        %575 = vperm.xlu0 %574, %v300
        %v576 = vpop.permute.xlu0 %575
        %578 = vset.pattern.permute.xlu0 2
        %579 = vperm.xlu0 %578, %v301
        %v580 = vpop.permute.xlu0 %579
        %582 = vset.pattern.permute.xlu0 2
        %583 = vperm.xlu0 %582, %v302
        %v584 = vpop.permute.xlu0 %583
        %586 = vset.pattern.permute.xlu0 2
        %587 = vperm.xlu0 %586, %v303
        %v588 = vpop.permute.xlu0 %587
        %590 = vset.pattern.permute.xlu0 2
        %591 = vperm.xlu0 %590, %v304
        %v592 = vpop.permute.xlu0 %591
        %594 = vset.pattern.permute.xlu0 2
        %595 = vperm.xlu0 %594, %v305
        %v596 = vpop.permute.xlu0 %595
        %598 = vset.pattern.permute.xlu0 2
        %599 = vperm.xlu0 %598, %v306
        %v600 = vpop.permute.xlu0 %599
        %602 = vset.pattern.permute.xlu0 2
        %603 = vperm.xlu0 %602, %v307
        %v604 = vpop.permute.xlu0 %603
        %v606 = vlaneseq
        %v607 = vshrl.u32 %v606, 7
        %v608 = vsub.s32 2, %v607
        %v609 = vrot.slane %v291, %v608
        %v610 = vsub.f32 %v544, %v609
        %v611 = vsub.f32 %v548, %v609
        %v612 = vsub.f32 %v552, %v609
        %v613 = vsub.f32 %v556, %v609
        %v614 = vsub.f32 %v560, %v609
        %v615 = vsub.f32 %v564, %v609
        %v616 = vsub.f32 %v568, %v609
        %v617 = vsub.f32 %v572, %v609
        %v618 = vsub.f32 %v576, %v609
        %v619 = vsub.f32 %v580, %v609
        %v620 = vsub.f32 %v584, %v609
        %v621 = vsub.f32 %v588, %v609
        %v622 = vsub.f32 %v592, %v609
        %v623 = vsub.f32 %v596, %v609
        %v624 = vsub.f32 %v600, %v609
        %v625 = vsub.f32 %v604, %v609
        %v626 = vmul.f32 %v610, %v610
        %v627 = vmul.f32 %v611, %v611
        %v628 = vmul.f32 %v612, %v612
        %v629 = vmul.f32 %v613, %v613
        %v630 = vmul.f32 %v614, %v614
        %v631 = vmul.f32 %v615, %v615
        %v632 = vmul.f32 %v616, %v616
        %v633 = vmul.f32 %v617, %v617
        %v634 = vmul.f32 %v618, %v618
        %v635 = vmul.f32 %v619, %v619
        %v636 = vmul.f32 %v620, %v620
        %v637 = vmul.f32 %v621, %v621
        %v638 = vmul.f32 %v622, %v622
        %v639 = vmul.f32 %v623, %v623
        %v640 = vmul.f32 %v624, %v624
        %v641 = vmul.f32 %v625, %v625
        %v642 = vadd.f32 %v526, %v626
        %v643 = vadd.f32 %v527, %v627
        %v644 = vadd.f32 %v528, %v628
        %v645 = vadd.f32 %v529, %v629
        %v646 = vadd.f32 %v530, %v630
        %v647 = vadd.f32 %v531, %v631
        %v648 = vadd.f32 %v532, %v632
        %v649 = vadd.f32 %v533, %v633
        %v650 = vadd.f32 %v534, %v634
        %v651 = vadd.f32 %v535, %v635
        %v652 = vadd.f32 %v536, %v636
        %v653 = vadd.f32 %v537, %v637
        %v654 = vadd.f32 %v538, %v638
        %v655 = vadd.f32 %v539, %v639
        %v656 = vadd.f32 %v540, %v640
        %v657 = vadd.f32 %v541, %v641
        %vm658 = vcmp.lt.f32.partialorder %v642, 0.25
        %vm659 = vcmp.lt.f32.partialorder %v643, 0.25
        %vm660 = vcmp.lt.f32.partialorder %v644, 0.25
        %vm661 = vcmp.lt.f32.partialorder %v645, 0.25
        %vm662 = vcmp.lt.f32.partialorder %v646, 0.25
        %vm663 = vcmp.lt.f32.partialorder %v647, 0.25
        %vm664 = vcmp.lt.f32.partialorder %v648, 0.25
        %vm665 = vcmp.lt.f32.partialorder %v649, 0.25
        %vm666 = vcmp.lt.f32.partialorder %v650, 0.25
        %vm667 = vcmp.lt.f32.partialorder %v651, 0.25
        %vm668 = vcmp.lt.f32.partialorder %v652, 0.25
        %vm669 = vcmp.lt.f32.partialorder %v653, 0.25
        %vm670 = vcmp.lt.f32.partialorder %v654, 0.25
        %vm671 = vcmp.lt.f32.partialorder %v655, 0.25
        %vm672 = vcmp.lt.f32.partialorder %v656, 0.25
        %vm673 = vcmp.lt.f32.partialorder %v657, 0.25
        %v674 = vsel %vm658, 1.0, 0.0
        %v675 = vsel %vm659, 1.0, 0.0
        %v676 = vsel %vm660, 1.0, 0.0
        %v677 = vsel %vm661, 1.0, 0.0
        %v678 = vsel %vm662, 1.0, 0.0
        %v679 = vsel %vm663, 1.0, 0.0
        %v680 = vsel %vm664, 1.0, 0.0
        %v681 = vsel %vm665, 1.0, 0.0
        %v682 = vsel %vm666, 1.0, 0.0
        %v683 = vsel %vm667, 1.0, 0.0
        %v684 = vsel %vm668, 1.0, 0.0
        %v685 = vsel %vm669, 1.0, 0.0
        %v686 = vsel %vm670, 1.0, 0.0
        %v687 = vsel %vm671, 1.0, 0.0
        %v688 = vsel %vm672, 1.0, 0.0
        %v689 = vsel %vm673, 1.0, 0.0
        %v690 = vlaneseq
        %v691 = vand.u32 %v690, 127
        %692 = vrot.lane.b32.xlu0 %v674, 1
        %v693 = vpop.permute.xlu0 %692
        %694 = vrot.lane.b32.xlu0 %v675, 1
        %v695 = vpop.permute.xlu0 %694
        %696 = vrot.lane.b32.xlu0 %v676, 1
        %v697 = vpop.permute.xlu0 %696
        %698 = vrot.lane.b32.xlu0 %v677, 1
        %v699 = vpop.permute.xlu0 %698
        %700 = vrot.lane.b32.xlu0 %v678, 1
        %v701 = vpop.permute.xlu0 %700
        %702 = vrot.lane.b32.xlu0 %v679, 1
        %v703 = vpop.permute.xlu0 %702
        %704 = vrot.lane.b32.xlu0 %v680, 1
        %v705 = vpop.permute.xlu0 %704
        %706 = vrot.lane.b32.xlu0 %v681, 1
        %v707 = vpop.permute.xlu0 %706
        %708 = vrot.lane.b32.xlu0 %v682, 1
        %v709 = vpop.permute.xlu0 %708
        %710 = vrot.lane.b32.xlu0 %v683, 1
        %v711 = vpop.permute.xlu0 %710
        %712 = vrot.lane.b32.xlu0 %v684, 1
        %v713 = vpop.permute.xlu0 %712
        %714 = vrot.lane.b32.xlu0 %v685, 1
        %v715 = vpop.permute.xlu0 %714
        %716 = vrot.lane.b32.xlu0 %v686, 1
        %v717 = vpop.permute.xlu0 %716
        %718 = vrot.lane.b32.xlu0 %v687, 1
        %v719 = vpop.permute.xlu0 %718
        %720 = vrot.lane.b32.xlu0 %v688, 1
        %v721 = vpop.permute.xlu0 %720
        %722 = vrot.lane.b32.xlu0 %v689, 1
        %v723 = vpop.permute.xlu0 %722
        %vm724 = vcmp.ge.s32.totalorder %v691, 1
        %v725 = vsel %vm724, 1, 0
        %vm726 = vcmp.eq.s32.totalorder %v725, 1
        %v727 = vsel %vm726, %v693, 0.0
        %v728 = vsel %vm726, %v695, 0.0
        %v729 = vsel %vm726, %v697, 0.0
        %v730 = vsel %vm726, %v699, 0.0
        %v731 = vsel %vm726, %v701, 0.0
        %v732 = vsel %vm726, %v703, 0.0
        %v733 = vsel %vm726, %v705, 0.0
        %v734 = vsel %vm726, %v707, 0.0
        %v735 = vsel %vm726, %v709, 0.0
        %v736 = vsel %vm726, %v711, 0.0
        %v737 = vsel %vm726, %v713, 0.0
        %v738 = vsel %vm726, %v715, 0.0
        %v739 = vsel %vm726, %v717, 0.0
        %v740 = vsel %vm726, %v719, 0.0
        %v741 = vsel %vm726, %v721, 0.0
        %v742 = vsel %vm726, %v723, 0.0
        %v743 = vadd.f32 %v674, %v727
        %v744 = vadd.f32 %v675, %v728
        %v745 = vadd.f32 %v676, %v729
        %v746 = vadd.f32 %v677, %v730
        %v747 = vadd.f32 %v678, %v731
        %v748 = vadd.f32 %v679, %v732
        %v749 = vadd.f32 %v680, %v733
        %v750 = vadd.f32 %v681, %v734
        %v751 = vadd.f32 %v682, %v735
        %v752 = vadd.f32 %v683, %v736
        %v753 = vadd.f32 %v684, %v737
        %v754 = vadd.f32 %v685, %v738
        %v755 = vadd.f32 %v686, %v739
        %v756 = vadd.f32 %v687, %v740
        %v757 = vadd.f32 %v688, %v741
        %v758 = vadd.f32 %v689, %v742
        %759 = vrot.lane.b32.xlu0 %v743, 2
        %v760 = vpop.permute.xlu0 %759
        %761 = vrot.lane.b32.xlu0 %v744, 2
        %v762 = vpop.permute.xlu0 %761
        %763 = vrot.lane.b32.xlu0 %v745, 2
        %v764 = vpop.permute.xlu0 %763
        %765 = vrot.lane.b32.xlu0 %v746, 2
        %v766 = vpop.permute.xlu0 %765
        %767 = vrot.lane.b32.xlu0 %v747, 2
        %v768 = vpop.permute.xlu0 %767
        %769 = vrot.lane.b32.xlu0 %v748, 2
        %v770 = vpop.permute.xlu0 %769
        %771 = vrot.lane.b32.xlu0 %v749, 2
        %v772 = vpop.permute.xlu0 %771
        %773 = vrot.lane.b32.xlu0 %v750, 2
        %v774 = vpop.permute.xlu0 %773
        %775 = vrot.lane.b32.xlu0 %v751, 2
        %v776 = vpop.permute.xlu0 %775
        %777 = vrot.lane.b32.xlu0 %v752, 2
        %v778 = vpop.permute.xlu0 %777
        %779 = vrot.lane.b32.xlu0 %v753, 2
        %v780 = vpop.permute.xlu0 %779
        %781 = vrot.lane.b32.xlu0 %v754, 2
        %v782 = vpop.permute.xlu0 %781
        %783 = vrot.lane.b32.xlu0 %v755, 2
        %v784 = vpop.permute.xlu0 %783
        %785 = vrot.lane.b32.xlu0 %v756, 2
        %v786 = vpop.permute.xlu0 %785
        %787 = vrot.lane.b32.xlu0 %v757, 2
        %v788 = vpop.permute.xlu0 %787
        %789 = vrot.lane.b32.xlu0 %v758, 2
        %v790 = vpop.permute.xlu0 %789
        %vm791 = vcmp.ge.s32.totalorder %v691, 2
        %v792 = vsel %vm791, 1, 0
        %vm793 = vcmp.eq.s32.totalorder %v792, 1
        %v794 = vsel %vm793, %v760, 0.0
        %v795 = vsel %vm793, %v762, 0.0
        %v796 = vsel %vm793, %v764, 0.0
        %v797 = vsel %vm793, %v766, 0.0
        %v798 = vsel %vm793, %v768, 0.0
        %v799 = vsel %vm793, %v770, 0.0
        %v800 = vsel %vm793, %v772, 0.0
        %v801 = vsel %vm793, %v774, 0.0
        %v802 = vsel %vm793, %v776, 0.0
        %v803 = vsel %vm793, %v778, 0.0
        %v804 = vsel %vm793, %v780, 0.0
        %v805 = vsel %vm793, %v782, 0.0
        %v806 = vsel %vm793, %v784, 0.0
        %v807 = vsel %vm793, %v786, 0.0
        %v808 = vsel %vm793, %v788, 0.0
        %v809 = vsel %vm793, %v790, 0.0
        %v810 = vadd.f32 %v743, %v794
        %v811 = vadd.f32 %v744, %v795
        %v812 = vadd.f32 %v745, %v796
        %v813 = vadd.f32 %v746, %v797
        %v814 = vadd.f32 %v747, %v798
        %v815 = vadd.f32 %v748, %v799
        %v816 = vadd.f32 %v749, %v800
        %v817 = vadd.f32 %v750, %v801
        %v818 = vadd.f32 %v751, %v802
        %v819 = vadd.f32 %v752, %v803
        %v820 = vadd.f32 %v753, %v804
        %v821 = vadd.f32 %v754, %v805
        %v822 = vadd.f32 %v755, %v806
        %v823 = vadd.f32 %v756, %v807
        %v824 = vadd.f32 %v757, %v808
        %v825 = vadd.f32 %v758, %v809
        %826 = vrot.lane.b32.xlu0 %v810, 4
        %v827 = vpop.permute.xlu0 %826
        %828 = vrot.lane.b32.xlu0 %v811, 4
        %v829 = vpop.permute.xlu0 %828
        %830 = vrot.lane.b32.xlu0 %v812, 4
        %v831 = vpop.permute.xlu0 %830
        %832 = vrot.lane.b32.xlu0 %v813, 4
        %v833 = vpop.permute.xlu0 %832
        %834 = vrot.lane.b32.xlu0 %v814, 4
        %v835 = vpop.permute.xlu0 %834
        %836 = vrot.lane.b32.xlu0 %v815, 4
        %v837 = vpop.permute.xlu0 %836
        %838 = vrot.lane.b32.xlu0 %v816, 4
        %v839 = vpop.permute.xlu0 %838
        %840 = vrot.lane.b32.xlu0 %v817, 4
        %v841 = vpop.permute.xlu0 %840
        %842 = vrot.lane.b32.xlu0 %v818, 4
        %v843 = vpop.permute.xlu0 %842
        %844 = vrot.lane.b32.xlu0 %v819, 4
        %v845 = vpop.permute.xlu0 %844
        %846 = vrot.lane.b32.xlu0 %v820, 4
        %v847 = vpop.permute.xlu0 %846
        %848 = vrot.lane.b32.xlu0 %v821, 4
        %v849 = vpop.permute.xlu0 %848
        %850 = vrot.lane.b32.xlu0 %v822, 4
        %v851 = vpop.permute.xlu0 %850
        %852 = vrot.lane.b32.xlu0 %v823, 4
        %v853 = vpop.permute.xlu0 %852
        %854 = vrot.lane.b32.xlu0 %v824, 4
        %v855 = vpop.permute.xlu0 %854
        %856 = vrot.lane.b32.xlu0 %v825, 4
        %v857 = vpop.permute.xlu0 %856
        %vm858 = vcmp.ge.s32.totalorder %v691, 4
        %v859 = vsel %vm858, 1, 0
        %vm860 = vcmp.eq.s32.totalorder %v859, 1
        %v861 = vsel %vm860, %v827, 0.0
        %v862 = vsel %vm860, %v829, 0.0
        %v863 = vsel %vm860, %v831, 0.0
        %v864 = vsel %vm860, %v833, 0.0
        %v865 = vsel %vm860, %v835, 0.0
        %v866 = vsel %vm860, %v837, 0.0
        %v867 = vsel %vm860, %v839, 0.0
        %v868 = vsel %vm860, %v841, 0.0
        %v869 = vsel %vm860, %v843, 0.0
        %v870 = vsel %vm860, %v845, 0.0
        %v871 = vsel %vm860, %v847, 0.0
        %v872 = vsel %vm860, %v849, 0.0
        %v873 = vsel %vm860, %v851, 0.0
        %v874 = vsel %vm860, %v853, 0.0
        %v875 = vsel %vm860, %v855, 0.0
        %v876 = vsel %vm860, %v857, 0.0
        %v877 = vadd.f32 %v810, %v861
        %v878 = vadd.f32 %v811, %v862
        %v879 = vadd.f32 %v812, %v863
        %v880 = vadd.f32 %v813, %v864
        %v881 = vadd.f32 %v814, %v865
        %v882 = vadd.f32 %v815, %v866
        %v883 = vadd.f32 %v816, %v867
        %v884 = vadd.f32 %v817, %v868
        %v885 = vadd.f32 %v818, %v869
        %v886 = vadd.f32 %v819, %v870
        %v887 = vadd.f32 %v820, %v871
        %v888 = vadd.f32 %v821, %v872
        %v889 = vadd.f32 %v822, %v873
        %v890 = vadd.f32 %v823, %v874
        %v891 = vadd.f32 %v824, %v875
        %v892 = vadd.f32 %v825, %v876
        %893 = vrot.lane.b32.xlu0 %v877, 8
        %v894 = vpop.permute.xlu0 %893
        %895 = vrot.lane.b32.xlu0 %v878, 8
        %v896 = vpop.permute.xlu0 %895
        %897 = vrot.lane.b32.xlu0 %v879, 8
        %v898 = vpop.permute.xlu0 %897
        %899 = vrot.lane.b32.xlu0 %v880, 8
        %v900 = vpop.permute.xlu0 %899
        %901 = vrot.lane.b32.xlu0 %v881, 8
        %v902 = vpop.permute.xlu0 %901
        %903 = vrot.lane.b32.xlu0 %v882, 8
        %v904 = vpop.permute.xlu0 %903
        %905 = vrot.lane.b32.xlu0 %v883, 8
        %v906 = vpop.permute.xlu0 %905
        %907 = vrot.lane.b32.xlu0 %v884, 8
        %v908 = vpop.permute.xlu0 %907
        %909 = vrot.lane.b32.xlu0 %v885, 8
        %v910 = vpop.permute.xlu0 %909
        %911 = vrot.lane.b32.xlu0 %v886, 8
        %v912 = vpop.permute.xlu0 %911
        %913 = vrot.lane.b32.xlu0 %v887, 8
        %v914 = vpop.permute.xlu0 %913
        %915 = vrot.lane.b32.xlu0 %v888, 8
        %v916 = vpop.permute.xlu0 %915
        %917 = vrot.lane.b32.xlu0 %v889, 8
        %v918 = vpop.permute.xlu0 %917
        %919 = vrot.lane.b32.xlu0 %v890, 8
        %v920 = vpop.permute.xlu0 %919
        %921 = vrot.lane.b32.xlu0 %v891, 8
        %v922 = vpop.permute.xlu0 %921
        %923 = vrot.lane.b32.xlu0 %v892, 8
        %v924 = vpop.permute.xlu0 %923
        %vm925 = vcmp.ge.s32.totalorder %v691, 8
        %v926 = vsel %vm925, 1, 0
        %vm927 = vcmp.eq.s32.totalorder %v926, 1
        %v928 = vsel %vm927, %v894, 0.0
        %v929 = vsel %vm927, %v896, 0.0
        %v930 = vsel %vm927, %v898, 0.0
        %v931 = vsel %vm927, %v900, 0.0
        %v932 = vsel %vm927, %v902, 0.0
        %v933 = vsel %vm927, %v904, 0.0
        %v934 = vsel %vm927, %v906, 0.0
        %v935 = vsel %vm927, %v908, 0.0
        %v936 = vsel %vm927, %v910, 0.0
        %v937 = vsel %vm927, %v912, 0.0
        %v938 = vsel %vm927, %v914, 0.0
        %v939 = vsel %vm927, %v916, 0.0
        %v940 = vsel %vm927, %v918, 0.0
        %v941 = vsel %vm927, %v920, 0.0
        %v942 = vsel %vm927, %v922, 0.0
        %v943 = vsel %vm927, %v924, 0.0
        %v944 = vadd.f32 %v877, %v928
        %v945 = vadd.f32 %v878, %v929
        %v946 = vadd.f32 %v879, %v930
        %v947 = vadd.f32 %v880, %v931
        %v948 = vadd.f32 %v881, %v932
        %v949 = vadd.f32 %v882, %v933
        %v950 = vadd.f32 %v883, %v934
        %v951 = vadd.f32 %v884, %v935
        %v952 = vadd.f32 %v885, %v936
        %v953 = vadd.f32 %v886, %v937
        %v954 = vadd.f32 %v887, %v938
        %v955 = vadd.f32 %v888, %v939
        %v956 = vadd.f32 %v889, %v940
        %v957 = vadd.f32 %v890, %v941
        %v958 = vadd.f32 %v891, %v942
        %v959 = vadd.f32 %v892, %v943
        %960 = vrot.lane.b32.xlu0 %v944, 16
        %v961 = vpop.permute.xlu0 %960
        %962 = vrot.lane.b32.xlu0 %v945, 16
        %v963 = vpop.permute.xlu0 %962
        %964 = vrot.lane.b32.xlu0 %v946, 16
        %v965 = vpop.permute.xlu0 %964
        %966 = vrot.lane.b32.xlu0 %v947, 16
        %v967 = vpop.permute.xlu0 %966
        %968 = vrot.lane.b32.xlu0 %v948, 16
        %v969 = vpop.permute.xlu0 %968
        %970 = vrot.lane.b32.xlu0 %v949, 16
        %v971 = vpop.permute.xlu0 %970
        %972 = vrot.lane.b32.xlu0 %v950, 16
        %v973 = vpop.permute.xlu0 %972
        %974 = vrot.lane.b32.xlu0 %v951, 16
        %v975 = vpop.permute.xlu0 %974
        %976 = vrot.lane.b32.xlu0 %v952, 16
        %v977 = vpop.permute.xlu0 %976
        %978 = vrot.lane.b32.xlu0 %v953, 16
        %v979 = vpop.permute.xlu0 %978
        %980 = vrot.lane.b32.xlu0 %v954, 16
        %v981 = vpop.permute.xlu0 %980
        %982 = vrot.lane.b32.xlu0 %v955, 16
        %v983 = vpop.permute.xlu0 %982
        %984 = vrot.lane.b32.xlu0 %v956, 16
        %v985 = vpop.permute.xlu0 %984
        %986 = vrot.lane.b32.xlu0 %v957, 16
        %v987 = vpop.permute.xlu0 %986
        %988 = vrot.lane.b32.xlu0 %v958, 16
        %v989 = vpop.permute.xlu0 %988
        %990 = vrot.lane.b32.xlu0 %v959, 16
        %v991 = vpop.permute.xlu0 %990
        %vm992 = vcmp.ge.s32.totalorder %v691, 16
        %v993 = vsel %vm992, 1, 0
        %vm994 = vcmp.eq.s32.totalorder %v993, 1
        %v995 = vsel %vm994, %v961, 0.0
        %v996 = vsel %vm994, %v963, 0.0
        %v997 = vsel %vm994, %v965, 0.0
        %v998 = vsel %vm994, %v967, 0.0
        %v999 = vsel %vm994, %v969, 0.0
        %v1000 = vsel %vm994, %v971, 0.0
        %v1001 = vsel %vm994, %v973, 0.0
        %v1002 = vsel %vm994, %v975, 0.0
        %v1003 = vsel %vm994, %v977, 0.0
        %v1004 = vsel %vm994, %v979, 0.0
        %v1005 = vsel %vm994, %v981, 0.0
        %v1006 = vsel %vm994, %v983, 0.0
        %v1007 = vsel %vm994, %v985, 0.0
        %v1008 = vsel %vm994, %v987, 0.0
        %v1009 = vsel %vm994, %v989, 0.0
        %v1010 = vsel %vm994, %v991, 0.0
        %v1011 = vadd.f32 %v944, %v995
        %v1012 = vadd.f32 %v945, %v996
        %v1013 = vadd.f32 %v946, %v997
        %v1014 = vadd.f32 %v947, %v998
        %v1015 = vadd.f32 %v948, %v999
        %v1016 = vadd.f32 %v949, %v1000
        %v1017 = vadd.f32 %v950, %v1001
        %v1018 = vadd.f32 %v951, %v1002
        %v1019 = vadd.f32 %v952, %v1003
        %v1020 = vadd.f32 %v953, %v1004
        %v1021 = vadd.f32 %v954, %v1005
        %v1022 = vadd.f32 %v955, %v1006
        %v1023 = vadd.f32 %v956, %v1007
        %v1024 = vadd.f32 %v957, %v1008
        %v1025 = vadd.f32 %v958, %v1009
        %v1026 = vadd.f32 %v959, %v1010
        %1027 = vrot.lane.b32.xlu0 %v1011, 32
        %v1028 = vpop.permute.xlu0 %1027
        %1029 = vrot.lane.b32.xlu0 %v1012, 32
        %v1030 = vpop.permute.xlu0 %1029
        %1031 = vrot.lane.b32.xlu0 %v1013, 32
        %v1032 = vpop.permute.xlu0 %1031
        %1033 = vrot.lane.b32.xlu0 %v1014, 32
        %v1034 = vpop.permute.xlu0 %1033
        %1035 = vrot.lane.b32.xlu0 %v1015, 32
        %v1036 = vpop.permute.xlu0 %1035
        %1037 = vrot.lane.b32.xlu0 %v1016, 32
        %v1038 = vpop.permute.xlu0 %1037
        %1039 = vrot.lane.b32.xlu0 %v1017, 32
        %v1040 = vpop.permute.xlu0 %1039
        %1041 = vrot.lane.b32.xlu0 %v1018, 32
        %v1042 = vpop.permute.xlu0 %1041
        %1043 = vrot.lane.b32.xlu0 %v1019, 32
        %v1044 = vpop.permute.xlu0 %1043
        %1045 = vrot.lane.b32.xlu0 %v1020, 32
        %v1046 = vpop.permute.xlu0 %1045
        %1047 = vrot.lane.b32.xlu0 %v1021, 32
        %v1048 = vpop.permute.xlu0 %1047
        %1049 = vrot.lane.b32.xlu0 %v1022, 32
        %v1050 = vpop.permute.xlu0 %1049
        %1051 = vrot.lane.b32.xlu0 %v1023, 32
        %v1052 = vpop.permute.xlu0 %1051
        %1053 = vrot.lane.b32.xlu0 %v1024, 32
        %v1054 = vpop.permute.xlu0 %1053
        %1055 = vrot.lane.b32.xlu0 %v1025, 32
        %v1056 = vpop.permute.xlu0 %1055
        %1057 = vrot.lane.b32.xlu0 %v1026, 32
        %v1058 = vpop.permute.xlu0 %1057
        %vm1059 = vcmp.ge.s32.totalorder %v691, 32
        %v1060 = vsel %vm1059, 1, 0
        %vm1061 = vcmp.eq.s32.totalorder %v1060, 1
        %v1062 = vsel %vm1061, %v1028, 0.0
        %v1063 = vsel %vm1061, %v1030, 0.0
        %v1064 = vsel %vm1061, %v1032, 0.0
        %v1065 = vsel %vm1061, %v1034, 0.0
        %v1066 = vsel %vm1061, %v1036, 0.0
        %v1067 = vsel %vm1061, %v1038, 0.0
        %v1068 = vsel %vm1061, %v1040, 0.0
        %v1069 = vsel %vm1061, %v1042, 0.0
        %v1070 = vsel %vm1061, %v1044, 0.0
        %v1071 = vsel %vm1061, %v1046, 0.0
        %v1072 = vsel %vm1061, %v1048, 0.0
        %v1073 = vsel %vm1061, %v1050, 0.0
        %v1074 = vsel %vm1061, %v1052, 0.0
        %v1075 = vsel %vm1061, %v1054, 0.0
        %v1076 = vsel %vm1061, %v1056, 0.0
        %v1077 = vsel %vm1061, %v1058, 0.0
        %v1078 = vadd.f32 %v1011, %v1062
        %v1079 = vadd.f32 %v1012, %v1063
        %v1080 = vadd.f32 %v1013, %v1064
        %v1081 = vadd.f32 %v1014, %v1065
        %v1082 = vadd.f32 %v1015, %v1066
        %v1083 = vadd.f32 %v1016, %v1067
        %v1084 = vadd.f32 %v1017, %v1068
        %v1085 = vadd.f32 %v1018, %v1069
        %v1086 = vadd.f32 %v1019, %v1070
        %v1087 = vadd.f32 %v1020, %v1071
        %v1088 = vadd.f32 %v1021, %v1072
        %v1089 = vadd.f32 %v1022, %v1073
        %v1090 = vadd.f32 %v1023, %v1074
        %v1091 = vadd.f32 %v1024, %v1075
        %v1092 = vadd.f32 %v1025, %v1076
        %v1093 = vadd.f32 %v1026, %v1077
        %1094 = vrot.lane.b32.xlu0 %v1078, 64
        %v1095 = vpop.permute.xlu0 %1094
        %1096 = vrot.lane.b32.xlu0 %v1079, 64
        %v1097 = vpop.permute.xlu0 %1096
        %1098 = vrot.lane.b32.xlu0 %v1080, 64
        %v1099 = vpop.permute.xlu0 %1098
        %1100 = vrot.lane.b32.xlu0 %v1081, 64
        %v1101 = vpop.permute.xlu0 %1100
        %1102 = vrot.lane.b32.xlu0 %v1082, 64
        %v1103 = vpop.permute.xlu0 %1102
        %1104 = vrot.lane.b32.xlu0 %v1083, 64
        %v1105 = vpop.permute.xlu0 %1104
        %1106 = vrot.lane.b32.xlu0 %v1084, 64
        %v1107 = vpop.permute.xlu0 %1106
        %1108 = vrot.lane.b32.xlu0 %v1085, 64
        %v1109 = vpop.permute.xlu0 %1108
        %1110 = vrot.lane.b32.xlu0 %v1086, 64
        %v1111 = vpop.permute.xlu0 %1110
        %1112 = vrot.lane.b32.xlu0 %v1087, 64
        %v1113 = vpop.permute.xlu0 %1112
        %1114 = vrot.lane.b32.xlu0 %v1088, 64
        %v1115 = vpop.permute.xlu0 %1114
        %1116 = vrot.lane.b32.xlu0 %v1089, 64
        %v1117 = vpop.permute.xlu0 %1116
        %1118 = vrot.lane.b32.xlu0 %v1090, 64
        %v1119 = vpop.permute.xlu0 %1118
        %1120 = vrot.lane.b32.xlu0 %v1091, 64
        %v1121 = vpop.permute.xlu0 %1120
        %1122 = vrot.lane.b32.xlu0 %v1092, 64
        %v1123 = vpop.permute.xlu0 %1122
        %1124 = vrot.lane.b32.xlu0 %v1093, 64
        %v1125 = vpop.permute.xlu0 %1124
        %vm1126 = vcmp.ge.s32.totalorder %v691, 64
        %v1127 = vsel %vm1126, 1, 0
        %vm1128 = vcmp.eq.s32.totalorder %v1127, 1
        %v1129 = vsel %vm1128, %v1095, 0.0
        %v1130 = vsel %vm1128, %v1097, 0.0
        %v1131 = vsel %vm1128, %v1099, 0.0
        %v1132 = vsel %vm1128, %v1101, 0.0
        %v1133 = vsel %vm1128, %v1103, 0.0
        %v1134 = vsel %vm1128, %v1105, 0.0
        %v1135 = vsel %vm1128, %v1107, 0.0
        %v1136 = vsel %vm1128, %v1109, 0.0
        %v1137 = vsel %vm1128, %v1111, 0.0
        %v1138 = vsel %vm1128, %v1113, 0.0
        %v1139 = vsel %vm1128, %v1115, 0.0
        %v1140 = vsel %vm1128, %v1117, 0.0
        %v1141 = vsel %vm1128, %v1119, 0.0
        %v1142 = vsel %vm1128, %v1121, 0.0
        %v1143 = vsel %vm1128, %v1123, 0.0
        %v1144 = vsel %vm1128, %v1125, 0.0
        %v1145 = vadd.f32 %v1078, %v1129
        %v1146 = vadd.f32 %v1079, %v1130
        %v1147 = vadd.f32 %v1080, %v1131
        %v1148 = vadd.f32 %v1081, %v1132
        %v1149 = vadd.f32 %v1082, %v1133
        %v1150 = vadd.f32 %v1083, %v1134
        %v1151 = vadd.f32 %v1084, %v1135
        %v1152 = vadd.f32 %v1085, %v1136
        %v1153 = vadd.f32 %v1086, %v1137
        %v1154 = vadd.f32 %v1087, %v1138
        %v1155 = vadd.f32 %v1088, %v1139
        %v1156 = vadd.f32 %v1089, %v1140
        %v1157 = vadd.f32 %v1090, %v1141
        %v1158 = vadd.f32 %v1091, %v1142
        %v1159 = vadd.f32 %v1092, %v1143
        %v1160 = vadd.f32 %v1093, %v1144
        %v1161 = vsub.f32 %v1145, %v674
        %v1162 = vsub.f32 %v1146, %v675
        %v1163 = vsub.f32 %v1147, %v676
        %v1164 = vsub.f32 %v1148, %v677
        %v1165 = vsub.f32 %v1149, %v678
        %v1166 = vsub.f32 %v1150, %v679
        %v1167 = vsub.f32 %v1151, %v680
        %v1168 = vsub.f32 %v1152, %v681
        %v1169 = vsub.f32 %v1153, %v682
        %v1170 = vsub.f32 %v1154, %v683
        %v1171 = vsub.f32 %v1155, %v684
        %v1172 = vsub.f32 %v1156, %v685
        %v1173 = vsub.f32 %v1157, %v686
        %v1174 = vsub.f32 %v1158, %v687
        %v1175 = vsub.f32 %v1159, %v688
        %v1176 = vsub.f32 %v1160, %v689
        %vm1177 = vcmp.eq.f32.partialorder %v1161, 0.0
        %vm1178 = vcmp.eq.f32.partialorder %v1162, 0.0
        %vm1179 = vcmp.eq.f32.partialorder %v1163, 0.0
        %vm1180 = vcmp.eq.f32.partialorder %v1164, 0.0
        %vm1181 = vcmp.eq.f32.partialorder %v1165, 0.0
        %vm1182 = vcmp.eq.f32.partialorder %v1166, 0.0
        %vm1183 = vcmp.eq.f32.partialorder %v1167, 0.0
        %vm1184 = vcmp.eq.f32.partialorder %v1168, 0.0
        %vm1185 = vcmp.eq.f32.partialorder %v1169, 0.0
        %vm1186 = vcmp.eq.f32.partialorder %v1170, 0.0
        %vm1187 = vcmp.eq.f32.partialorder %v1171, 0.0
        %vm1188 = vcmp.eq.f32.partialorder %v1172, 0.0
        %vm1189 = vcmp.eq.f32.partialorder %v1173, 0.0
        %vm1190 = vcmp.eq.f32.partialorder %v1174, 0.0
        %vm1191 = vcmp.eq.f32.partialorder %v1175, 0.0
        %vm1192 = vcmp.eq.f32.partialorder %v1176, 0.0
        %v1193 = vsel %vm1177, %v674, 0.0
        %v1194 = vsel %vm1178, %v675, 0.0
        %v1195 = vsel %vm1179, %v676, 0.0
        %v1196 = vsel %vm1180, %v677, 0.0
        %v1197 = vsel %vm1181, %v678, 0.0
        %v1198 = vsel %vm1182, %v679, 0.0
        %v1199 = vsel %vm1183, %v680, 0.0
        %v1200 = vsel %vm1184, %v681, 0.0
        %v1201 = vsel %vm1185, %v682, 0.0
        %v1202 = vsel %vm1186, %v683, 0.0
        %v1203 = vsel %vm1187, %v684, 0.0
        %v1204 = vsel %vm1188, %v685, 0.0
        %v1205 = vsel %vm1189, %v686, 0.0
        %v1206 = vsel %vm1190, %v687, 0.0
        %v1207 = vsel %vm1191, %v688, 0.0
        %v1208 = vsel %vm1192, %v689, 0.0
        %vm1209 = vcmp.gt.f32.partialorder %v1145, 0.0
        %vm1210 = vcmp.gt.f32.partialorder %v1146, 0.0
        %vm1211 = vcmp.gt.f32.partialorder %v1147, 0.0
        %vm1212 = vcmp.gt.f32.partialorder %v1148, 0.0
        %vm1213 = vcmp.gt.f32.partialorder %v1149, 0.0
        %vm1214 = vcmp.gt.f32.partialorder %v1150, 0.0
        %vm1215 = vcmp.gt.f32.partialorder %v1151, 0.0
        %vm1216 = vcmp.gt.f32.partialorder %v1152, 0.0
        %vm1217 = vcmp.gt.f32.partialorder %v1153, 0.0
        %vm1218 = vcmp.gt.f32.partialorder %v1154, 0.0
        %vm1219 = vcmp.gt.f32.partialorder %v1155, 0.0
        %vm1220 = vcmp.gt.f32.partialorder %v1156, 0.0
        %vm1221 = vcmp.gt.f32.partialorder %v1157, 0.0
        %vm1222 = vcmp.gt.f32.partialorder %v1158, 0.0
        %vm1223 = vcmp.gt.f32.partialorder %v1159, 0.0
        %vm1224 = vcmp.gt.f32.partialorder %v1160, 0.0
        %vm1225 = vcmp.eq.s32.totalorder %v691, 0
        %v1226 = vsel %vm1225, 1.0, 0.0
        %v1227 = vsel %vm1209, 1, 0
        %v1228 = vsel %vm1210, 1, 0
        %v1229 = vsel %vm1211, 1, 0
        %v1230 = vsel %vm1212, 1, 0
        %v1231 = vsel %vm1213, 1, 0
        %v1232 = vsel %vm1214, 1, 0
        %v1233 = vsel %vm1215, 1, 0
        %v1234 = vsel %vm1216, 1, 0
        %v1235 = vsel %vm1217, 1, 0
        %v1236 = vsel %vm1218, 1, 0
        %v1237 = vsel %vm1219, 1, 0
        %v1238 = vsel %vm1220, 1, 0
        %v1239 = vsel %vm1221, 1, 0
        %v1240 = vsel %vm1222, 1, 0
        %v1241 = vsel %vm1223, 1, 0
        %v1242 = vsel %vm1224, 1, 0
        %1243 = vset.pattern.permute.xlu0 127
        %1244 = vperm.xlu0 %1243, %v1227
        %v1245 = vpop.permute.xlu0 %1244
        %1246 = vset.pattern.permute.xlu0 127
        %1247 = vperm.xlu0 %1246, %v1228
        %v1248 = vpop.permute.xlu0 %1247
        %1249 = vset.pattern.permute.xlu0 127
        %1250 = vperm.xlu0 %1249, %v1229
        %v1251 = vpop.permute.xlu0 %1250
        %1252 = vset.pattern.permute.xlu0 127
        %1253 = vperm.xlu0 %1252, %v1230
        %v1254 = vpop.permute.xlu0 %1253
        %1255 = vset.pattern.permute.xlu0 127
        %1256 = vperm.xlu0 %1255, %v1231
        %v1257 = vpop.permute.xlu0 %1256
        %1258 = vset.pattern.permute.xlu0 127
        %1259 = vperm.xlu0 %1258, %v1232
        %v1260 = vpop.permute.xlu0 %1259
        %1261 = vset.pattern.permute.xlu0 127
        %1262 = vperm.xlu0 %1261, %v1233
        %v1263 = vpop.permute.xlu0 %1262
        %1264 = vset.pattern.permute.xlu0 127
        %1265 = vperm.xlu0 %1264, %v1234
        %v1266 = vpop.permute.xlu0 %1265
        %1267 = vset.pattern.permute.xlu0 127
        %1268 = vperm.xlu0 %1267, %v1235
        %v1269 = vpop.permute.xlu0 %1268
        %1270 = vset.pattern.permute.xlu0 127
        %1271 = vperm.xlu0 %1270, %v1236
        %v1272 = vpop.permute.xlu0 %1271
        %1273 = vset.pattern.permute.xlu0 127
        %1274 = vperm.xlu0 %1273, %v1237
        %v1275 = vpop.permute.xlu0 %1274
        %1276 = vset.pattern.permute.xlu0 127
        %1277 = vperm.xlu0 %1276, %v1238
        %v1278 = vpop.permute.xlu0 %1277
        %1279 = vset.pattern.permute.xlu0 127
        %1280 = vperm.xlu0 %1279, %v1239
        %v1281 = vpop.permute.xlu0 %1280
        %1282 = vset.pattern.permute.xlu0 127
        %1283 = vperm.xlu0 %1282, %v1240
        %v1284 = vpop.permute.xlu0 %1283
        %1285 = vset.pattern.permute.xlu0 127
        %1286 = vperm.xlu0 %1285, %v1241
        %v1287 = vpop.permute.xlu0 %1286
        %1288 = vset.pattern.permute.xlu0 127
        %1289 = vperm.xlu0 %1288, %v1242
        %v1290 = vpop.permute.xlu0 %1289
        %vm1291 = vcmp.eq.s32.totalorder %v1245, 1
        %vm1292 = vcmp.eq.s32.totalorder %v1248, 1
        %vm1293 = vcmp.eq.s32.totalorder %v1251, 1
        %vm1294 = vcmp.eq.s32.totalorder %v1254, 1
        %vm1295 = vcmp.eq.s32.totalorder %v1257, 1
        %vm1296 = vcmp.eq.s32.totalorder %v1260, 1
        %vm1297 = vcmp.eq.s32.totalorder %v1263, 1
        %vm1298 = vcmp.eq.s32.totalorder %v1266, 1
        %vm1299 = vcmp.eq.s32.totalorder %v1269, 1
        %vm1300 = vcmp.eq.s32.totalorder %v1272, 1
        %vm1301 = vcmp.eq.s32.totalorder %v1275, 1
        %vm1302 = vcmp.eq.s32.totalorder %v1278, 1
        %vm1303 = vcmp.eq.s32.totalorder %v1281, 1
        %vm1304 = vcmp.eq.s32.totalorder %v1284, 1
        %vm1305 = vcmp.eq.s32.totalorder %v1287, 1
        %vm1306 = vcmp.eq.s32.totalorder %v1290, 1
        %v1307 = vsel %vm1291, %v1193, %v1226
        %v1308 = vsel %vm1292, %v1194, %v1226
        %v1309 = vsel %vm1293, %v1195, %v1226
        %v1310 = vsel %vm1294, %v1196, %v1226
        %v1311 = vsel %vm1295, %v1197, %v1226
        %v1312 = vsel %vm1296, %v1198, %v1226
        %v1313 = vsel %vm1297, %v1199, %v1226
        %v1314 = vsel %vm1298, %v1200, %v1226
        %v1315 = vsel %vm1299, %v1201, %v1226
        %v1316 = vsel %vm1300, %v1202, %v1226
        %v1317 = vsel %vm1301, %v1203, %v1226
        %v1318 = vsel %vm1302, %v1204, %v1226
        %v1319 = vsel %vm1303, %v1205, %v1226
        %v1320 = vsel %vm1304, %v1206, %v1226
        %v1321 = vsel %vm1305, %v1207, %v1226
        %v1322 = vsel %vm1306, %v1208, %v1226
        %v1323 = vpack.c.bf16 %v1308, %v1307
        %v1324 = vpack.c.bf16 %v1310, %v1309
        %v1325 = vpack.c.bf16 %v1312, %v1311
        %v1326 = vpack.c.bf16 %v1314, %v1313
        %v1327 = vpack.c.bf16 %v1316, %v1315
        %v1328 = vpack.c.bf16 %v1318, %v1317
        %v1329 = vpack.c.bf16 %v1320, %v1319
        %v1330 = vpack.c.bf16 %v1322, %v1321
        %v1331 = vpack.c.bf16 %v675, %v674
        %v1332 = vpack.c.bf16 %v677, %v676
        %v1333 = vpack.c.bf16 %v679, %v678
        %v1334 = vpack.c.bf16 %v681, %v680
        %v1335 = vpack.c.bf16 %v683, %v682
        %v1336 = vpack.c.bf16 %v685, %v684
        %v1337 = vpack.c.bf16 %v687, %v686
        %v1338 = vpack.c.bf16 %v689, %v688
        %v1339 = vpack.c.bf16 %v308, %v308
        %v1340 = vunpack.c.l.bf16 %v1339
        %v1341 = vsub.f32 %v308, %v1340
        %v1342 = vpack.c.bf16 %v1341, %v1341
        %vm1343 = vmpackc.low %vm1178, %vm1177
        %vm1344 = vmpackc.low %vm1180, %vm1179
        %vm1345 = vmpackc.low %vm1182, %vm1181
        %vm1346 = vmpackc.low %vm1184, %vm1183
        %vm1347 = vmpackc.low %vm1186, %vm1185
        %vm1348 = vmpackc.low %vm1188, %vm1187
        %vm1349 = vmpackc.low %vm1190, %vm1189
        %vm1350 = vmpackc.low %vm1192, %vm1191
        %v1351 = vsel %vm1343, %v1331, 0
        %v1352 = vsel %vm1344, %v1332, 0
        %v1353 = vsel %vm1345, %v1333, 0
        %v1354 = vsel %vm1346, %v1334, 0
        %v1355 = vsel %vm1347, %v1335, 0
        %v1356 = vsel %vm1348, %v1336, 0
        %v1357 = vsel %vm1349, %v1337, 0
        %v1358 = vsel %vm1350, %v1338, 0
        %vm1359 = vmpackc.low %vm1291, %vm1291
        %vm1360 = vmpackc.low %vm1292, %vm1292
        %vm1361 = vmpackc.low %vm1293, %vm1293
        %vm1362 = vmpackc.low %vm1294, %vm1294
        %vm1363 = vmpackc.low %vm1295, %vm1295
        %vm1364 = vmpackc.low %vm1296, %vm1296
        %vm1365 = vmpackc.low %vm1297, %vm1297
        %vm1366 = vmpackc.low %vm1298, %vm1298
        %vm1367 = vmpackc.low %vm1299, %vm1299
        %vm1368 = vmpackc.low %vm1300, %vm1300
        %vm1369 = vmpackc.low %vm1301, %vm1301
        %vm1370 = vmpackc.low %vm1302, %vm1302
        %vm1371 = vmpackc.low %vm1303, %vm1303
        %vm1372 = vmpackc.low %vm1304, %vm1304
        %vm1373 = vmpackc.low %vm1305, %vm1305
        %vm1374 = vmpackc.low %vm1306, %vm1306
        %v1375 = vsel %vm1359, 65537, 0
        %v1376 = vsel %vm1360, 65537, 0
        %v1377 = vsel %vm1361, 65537, 0
        %v1378 = vsel %vm1362, 65537, 0
        %v1379 = vsel %vm1363, 65537, 0
        %v1380 = vsel %vm1364, 65537, 0
        %v1381 = vsel %vm1365, 65537, 0
        %v1382 = vsel %vm1366, 65537, 0
        %v1383 = vsel %vm1367, 65537, 0
        %v1384 = vsel %vm1368, 65537, 0
        %v1385 = vsel %vm1369, 65537, 0
        %v1386 = vsel %vm1370, 65537, 0
        %v1387 = vsel %vm1371, 65537, 0
        %v1388 = vsel %vm1372, 65537, 0
        %v1389 = vsel %vm1373, 65537, 0
        %v1390 = vsel %vm1374, 65537, 0
        %v1391 = vunpack.c.l.b16 %v1375
        %v1392 = vunpack.c.l.b16 %v1376
        %v1393 = vunpack.c.l.b16 %v1377
        %v1394 = vunpack.c.l.b16 %v1378
        %v1395 = vunpack.c.l.b16 %v1379
        %v1396 = vunpack.c.l.b16 %v1380
        %v1397 = vunpack.c.l.b16 %v1381
        %v1398 = vunpack.c.l.b16 %v1382
        %v1399 = vunpack.c.l.b16 %v1383
        %v1400 = vunpack.c.l.b16 %v1384
        %v1401 = vunpack.c.l.b16 %v1385
        %v1402 = vunpack.c.l.b16 %v1386
        %v1403 = vunpack.c.l.b16 %v1387
        %v1404 = vunpack.c.l.b16 %v1388
        %v1405 = vunpack.c.l.b16 %v1389
        %v1406 = vunpack.c.l.b16 %v1390
        %v1407 = vpack.c.b16 %v1392, %v1391
        %v1408 = vpack.c.b16 %v1394, %v1393
        %v1409 = vpack.c.b16 %v1396, %v1395
        %v1410 = vpack.c.b16 %v1398, %v1397
        %v1411 = vpack.c.b16 %v1400, %v1399
        %v1412 = vpack.c.b16 %v1402, %v1401
        %v1413 = vpack.c.b16 %v1404, %v1403
        %v1414 = vpack.c.b16 %v1406, %v1405
        %vm1415 = vcmp.ne.s16.totalorder %v1407, 0
        %vm1416 = vcmp.ne.s16.totalorder %v1408, 0
        %vm1417 = vcmp.ne.s16.totalorder %v1409, 0
        %vm1418 = vcmp.ne.s16.totalorder %v1410, 0
        %vm1419 = vcmp.ne.s16.totalorder %v1411, 0
        %vm1420 = vcmp.ne.s16.totalorder %v1412, 0
        %vm1421 = vcmp.ne.s16.totalorder %v1413, 0
        %vm1422 = vcmp.ne.s16.totalorder %v1414, 0
        %v1423 = vsel %vm1415, %v1351, %v1323
        %v1424 = vsel %vm1416, %v1352, %v1324
        %v1425 = vsel %vm1417, %v1353, %v1325
        %v1426 = vsel %vm1418, %v1354, %v1326
        %v1427 = vsel %vm1419, %v1355, %v1327
        %v1428 = vsel %vm1420, %v1356, %v1328
        %v1429 = vsel %vm1421, %v1357, %v1329
        %v1430 = vsel %vm1422, %v1358, %v1330
        %vm1431 = vcmp.eq.f32.partialorder %v1161, 1.0
        %vm1432 = vcmp.eq.f32.partialorder %v1162, 1.0
        %vm1433 = vcmp.eq.f32.partialorder %v1163, 1.0
        %vm1434 = vcmp.eq.f32.partialorder %v1164, 1.0
        %vm1435 = vcmp.eq.f32.partialorder %v1165, 1.0
        %vm1436 = vcmp.eq.f32.partialorder %v1166, 1.0
        %vm1437 = vcmp.eq.f32.partialorder %v1167, 1.0
        %vm1438 = vcmp.eq.f32.partialorder %v1168, 1.0
        %vm1439 = vcmp.eq.f32.partialorder %v1169, 1.0
        %vm1440 = vcmp.eq.f32.partialorder %v1170, 1.0
        %vm1441 = vcmp.eq.f32.partialorder %v1171, 1.0
        %vm1442 = vcmp.eq.f32.partialorder %v1172, 1.0
        %vm1443 = vcmp.eq.f32.partialorder %v1173, 1.0
        %vm1444 = vcmp.eq.f32.partialorder %v1174, 1.0
        %vm1445 = vcmp.eq.f32.partialorder %v1175, 1.0
        %vm1446 = vcmp.eq.f32.partialorder %v1176, 1.0
        %vm1447 = vmpackc.low %vm1432, %vm1431
        %vm1448 = vmpackc.low %vm1434, %vm1433
        %vm1449 = vmpackc.low %vm1436, %vm1435
        %vm1450 = vmpackc.low %vm1438, %vm1437
        %vm1451 = vmpackc.low %vm1440, %vm1439
        %vm1452 = vmpackc.low %vm1442, %vm1441
        %vm1453 = vmpackc.low %vm1444, %vm1443
        %vm1454 = vmpackc.low %vm1446, %vm1445
        %v1455 = vsel %vm1447, %v1331, 0
        %v1456 = vsel %vm1448, %v1332, 0
        %v1457 = vsel %vm1449, %v1333, 0
        %v1458 = vsel %vm1450, %v1334, 0
        %v1459 = vsel %vm1451, %v1335, 0
        %v1460 = vsel %vm1452, %v1336, 0
        %v1461 = vsel %vm1453, %v1337, 0
        %v1462 = vsel %vm1454, %v1338, 0
        %vm1463 = vcmp.gt.f32.partialorder %v1145, 1.0
        %vm1464 = vcmp.gt.f32.partialorder %v1146, 1.0
        %vm1465 = vcmp.gt.f32.partialorder %v1147, 1.0
        %vm1466 = vcmp.gt.f32.partialorder %v1148, 1.0
        %vm1467 = vcmp.gt.f32.partialorder %v1149, 1.0
        %vm1468 = vcmp.gt.f32.partialorder %v1150, 1.0
        %vm1469 = vcmp.gt.f32.partialorder %v1151, 1.0
        %vm1470 = vcmp.gt.f32.partialorder %v1152, 1.0
        %vm1471 = vcmp.gt.f32.partialorder %v1153, 1.0
        %vm1472 = vcmp.gt.f32.partialorder %v1154, 1.0
        %vm1473 = vcmp.gt.f32.partialorder %v1155, 1.0
        %vm1474 = vcmp.gt.f32.partialorder %v1156, 1.0
        %vm1475 = vcmp.gt.f32.partialorder %v1157, 1.0
        %vm1476 = vcmp.gt.f32.partialorder %v1158, 1.0
        %vm1477 = vcmp.gt.f32.partialorder %v1159, 1.0
        %vm1478 = vcmp.gt.f32.partialorder %v1160, 1.0
        %v1479 = vsel %vm1463, 1, 0
        %v1480 = vsel %vm1464, 1, 0
        %v1481 = vsel %vm1465, 1, 0
        %v1482 = vsel %vm1466, 1, 0
        %v1483 = vsel %vm1467, 1, 0
        %v1484 = vsel %vm1468, 1, 0
        %v1485 = vsel %vm1469, 1, 0
        %v1486 = vsel %vm1470, 1, 0
        %v1487 = vsel %vm1471, 1, 0
        %v1488 = vsel %vm1472, 1, 0
        %v1489 = vsel %vm1473, 1, 0
        %v1490 = vsel %vm1474, 1, 0
        %v1491 = vsel %vm1475, 1, 0
        %v1492 = vsel %vm1476, 1, 0
        %v1493 = vsel %vm1477, 1, 0
        %v1494 = vsel %vm1478, 1, 0
        %1495 = vset.pattern.permute.xlu0 127
        %1496 = vperm.xlu0 %1495, %v1479
        %v1497 = vpop.permute.xlu0 %1496
        %1498 = vset.pattern.permute.xlu0 127
        %1499 = vperm.xlu0 %1498, %v1480
        %v1500 = vpop.permute.xlu0 %1499
        %1501 = vset.pattern.permute.xlu0 127
        %1502 = vperm.xlu0 %1501, %v1481
        %v1503 = vpop.permute.xlu0 %1502
        %1504 = vset.pattern.permute.xlu0 127
        %1505 = vperm.xlu0 %1504, %v1482
        %v1506 = vpop.permute.xlu0 %1505
        %1507 = vset.pattern.permute.xlu0 127
        %1508 = vperm.xlu0 %1507, %v1483
        %v1509 = vpop.permute.xlu0 %1508
        %1510 = vset.pattern.permute.xlu0 127
        %1511 = vperm.xlu0 %1510, %v1484
        %v1512 = vpop.permute.xlu0 %1511
        %1513 = vset.pattern.permute.xlu0 127
        %1514 = vperm.xlu0 %1513, %v1485
        %v1515 = vpop.permute.xlu0 %1514
        %1516 = vset.pattern.permute.xlu0 127
        %1517 = vperm.xlu0 %1516, %v1486
        %v1518 = vpop.permute.xlu0 %1517
        %1519 = vset.pattern.permute.xlu0 127
        %1520 = vperm.xlu0 %1519, %v1487
        %v1521 = vpop.permute.xlu0 %1520
        %1522 = vset.pattern.permute.xlu0 127
        %1523 = vperm.xlu0 %1522, %v1488
        %v1524 = vpop.permute.xlu0 %1523
        %1525 = vset.pattern.permute.xlu0 127
        %1526 = vperm.xlu0 %1525, %v1489
        %v1527 = vpop.permute.xlu0 %1526
        %1528 = vset.pattern.permute.xlu0 127
        %1529 = vperm.xlu0 %1528, %v1490
        %v1530 = vpop.permute.xlu0 %1529
        %1531 = vset.pattern.permute.xlu0 127
        %1532 = vperm.xlu0 %1531, %v1491
        %v1533 = vpop.permute.xlu0 %1532
        %1534 = vset.pattern.permute.xlu0 127
        %1535 = vperm.xlu0 %1534, %v1492
        %v1536 = vpop.permute.xlu0 %1535
        %1537 = vset.pattern.permute.xlu0 127
        %1538 = vperm.xlu0 %1537, %v1493
        %v1539 = vpop.permute.xlu0 %1538
        %1540 = vset.pattern.permute.xlu0 127
        %1541 = vperm.xlu0 %1540, %v1494
        %v1542 = vpop.permute.xlu0 %1541
        %vm1543 = vcmp.eq.s32.totalorder %v1497, 1
        %vm1544 = vcmp.eq.s32.totalorder %v1500, 1
        %vm1545 = vcmp.eq.s32.totalorder %v1503, 1
        %vm1546 = vcmp.eq.s32.totalorder %v1506, 1
        %vm1547 = vcmp.eq.s32.totalorder %v1509, 1
        %vm1548 = vcmp.eq.s32.totalorder %v1512, 1
        %vm1549 = vcmp.eq.s32.totalorder %v1515, 1
        %vm1550 = vcmp.eq.s32.totalorder %v1518, 1
        %vm1551 = vcmp.eq.s32.totalorder %v1521, 1
        %vm1552 = vcmp.eq.s32.totalorder %v1524, 1
        %vm1553 = vcmp.eq.s32.totalorder %v1527, 1
        %vm1554 = vcmp.eq.s32.totalorder %v1530, 1
        %vm1555 = vcmp.eq.s32.totalorder %v1533, 1
        %vm1556 = vcmp.eq.s32.totalorder %v1536, 1
        %vm1557 = vcmp.eq.s32.totalorder %v1539, 1
        %vm1558 = vcmp.eq.s32.totalorder %v1542, 1
        %vm1559 = vmpackc.low %vm1543, %vm1543
        %vm1560 = vmpackc.low %vm1544, %vm1544
        %vm1561 = vmpackc.low %vm1545, %vm1545
        %vm1562 = vmpackc.low %vm1546, %vm1546
        %vm1563 = vmpackc.low %vm1547, %vm1547
        %vm1564 = vmpackc.low %vm1548, %vm1548
        %vm1565 = vmpackc.low %vm1549, %vm1549
        %vm1566 = vmpackc.low %vm1550, %vm1550
        %vm1567 = vmpackc.low %vm1551, %vm1551
        %vm1568 = vmpackc.low %vm1552, %vm1552
        %vm1569 = vmpackc.low %vm1553, %vm1553
        %vm1570 = vmpackc.low %vm1554, %vm1554
        %vm1571 = vmpackc.low %vm1555, %vm1555
        %vm1572 = vmpackc.low %vm1556, %vm1556
        %vm1573 = vmpackc.low %vm1557, %vm1557
        %vm1574 = vmpackc.low %vm1558, %vm1558
        %v1575 = vsel %vm1559, 65537, 0
        %v1576 = vsel %vm1560, 65537, 0
        %v1577 = vsel %vm1561, 65537, 0
        %v1578 = vsel %vm1562, 65537, 0
        %v1579 = vsel %vm1563, 65537, 0
        %v1580 = vsel %vm1564, 65537, 0
        %v1581 = vsel %vm1565, 65537, 0
        %v1582 = vsel %vm1566, 65537, 0
        %v1583 = vsel %vm1567, 65537, 0
        %v1584 = vsel %vm1568, 65537, 0
        %v1585 = vsel %vm1569, 65537, 0
        %v1586 = vsel %vm1570, 65537, 0
        %v1587 = vsel %vm1571, 65537, 0
        %v1588 = vsel %vm1572, 65537, 0
        %v1589 = vsel %vm1573, 65537, 0
        %v1590 = vsel %vm1574, 65537, 0
        %v1591 = vunpack.c.l.b16 %v1575
        %v1592 = vunpack.c.l.b16 %v1576
        %v1593 = vunpack.c.l.b16 %v1577
        %v1594 = vunpack.c.l.b16 %v1578
        %v1595 = vunpack.c.l.b16 %v1579
        %v1596 = vunpack.c.l.b16 %v1580
        %v1597 = vunpack.c.l.b16 %v1581
        %v1598 = vunpack.c.l.b16 %v1582
        %v1599 = vunpack.c.l.b16 %v1583
        %v1600 = vunpack.c.l.b16 %v1584
        %v1601 = vunpack.c.l.b16 %v1585
        %v1602 = vunpack.c.l.b16 %v1586
        %v1603 = vunpack.c.l.b16 %v1587
        %v1604 = vunpack.c.l.b16 %v1588
        %v1605 = vunpack.c.l.b16 %v1589
        %v1606 = vunpack.c.l.b16 %v1590
        %v1607 = vpack.c.b16 %v1592, %v1591
        %v1608 = vpack.c.b16 %v1594, %v1593
        %v1609 = vpack.c.b16 %v1596, %v1595
        %v1610 = vpack.c.b16 %v1598, %v1597
        %v1611 = vpack.c.b16 %v1600, %v1599
        %v1612 = vpack.c.b16 %v1602, %v1601
        %v1613 = vpack.c.b16 %v1604, %v1603
        %v1614 = vpack.c.b16 %v1606, %v1605
        %vm1615 = vcmp.ne.s16.totalorder %v1607, 0
        %vm1616 = vcmp.ne.s16.totalorder %v1608, 0
        %vm1617 = vcmp.ne.s16.totalorder %v1609, 0
        %vm1618 = vcmp.ne.s16.totalorder %v1610, 0
        %vm1619 = vcmp.ne.s16.totalorder %v1611, 0
        %vm1620 = vcmp.ne.s16.totalorder %v1612, 0
        %vm1621 = vcmp.ne.s16.totalorder %v1613, 0
        %vm1622 = vcmp.ne.s16.totalorder %v1614, 0
        %v1623 = vsel %vm1615, %v1455, %v1323
        %v1624 = vsel %vm1616, %v1456, %v1324
        %v1625 = vsel %vm1617, %v1457, %v1325
        %v1626 = vsel %vm1618, %v1458, %v1326
        %v1627 = vsel %vm1619, %v1459, %v1327
        %v1628 = vsel %vm1620, %v1460, %v1328
        %v1629 = vsel %vm1621, %v1461, %v1329
        %v1630 = vsel %vm1622, %v1462, %v1330
        %vm1631 = vcmp.eq.f32.partialorder %v1161, 2.0
        %vm1632 = vcmp.eq.f32.partialorder %v1162, 2.0
        %vm1633 = vcmp.eq.f32.partialorder %v1163, 2.0
        %vm1634 = vcmp.eq.f32.partialorder %v1164, 2.0
        %vm1635 = vcmp.eq.f32.partialorder %v1165, 2.0
        %vm1636 = vcmp.eq.f32.partialorder %v1166, 2.0
        %vm1637 = vcmp.eq.f32.partialorder %v1167, 2.0
        %vm1638 = vcmp.eq.f32.partialorder %v1168, 2.0
        %vm1639 = vcmp.eq.f32.partialorder %v1169, 2.0
        %vm1640 = vcmp.eq.f32.partialorder %v1170, 2.0
        %vm1641 = vcmp.eq.f32.partialorder %v1171, 2.0
        %vm1642 = vcmp.eq.f32.partialorder %v1172, 2.0
        %vm1643 = vcmp.eq.f32.partialorder %v1173, 2.0
        %vm1644 = vcmp.eq.f32.partialorder %v1174, 2.0
        %vm1645 = vcmp.eq.f32.partialorder %v1175, 2.0
        %vm1646 = vcmp.eq.f32.partialorder %v1176, 2.0
        %vm1647 = vmpackc.low %vm1632, %vm1631
        %vm1648 = vmpackc.low %vm1634, %vm1633
        %vm1649 = vmpackc.low %vm1636, %vm1635
        %vm1650 = vmpackc.low %vm1638, %vm1637
        %vm1651 = vmpackc.low %vm1640, %vm1639
        %vm1652 = vmpackc.low %vm1642, %vm1641
        %vm1653 = vmpackc.low %vm1644, %vm1643
        %vm1654 = vmpackc.low %vm1646, %vm1645
        %v1655 = vsel %vm1647, %v1331, 0
        %v1656 = vsel %vm1648, %v1332, 0
        %v1657 = vsel %vm1649, %v1333, 0
        %v1658 = vsel %vm1650, %v1334, 0
        %v1659 = vsel %vm1651, %v1335, 0
        %v1660 = vsel %vm1652, %v1336, 0
        %v1661 = vsel %vm1653, %v1337, 0
        %v1662 = vsel %vm1654, %v1338, 0
        %vm1663 = vcmp.gt.f32.partialorder %v1145, 2.0
        %vm1664 = vcmp.gt.f32.partialorder %v1146, 2.0
        %vm1665 = vcmp.gt.f32.partialorder %v1147, 2.0
        %vm1666 = vcmp.gt.f32.partialorder %v1148, 2.0
        %vm1667 = vcmp.gt.f32.partialorder %v1149, 2.0
        %vm1668 = vcmp.gt.f32.partialorder %v1150, 2.0
        %vm1669 = vcmp.gt.f32.partialorder %v1151, 2.0
        %vm1670 = vcmp.gt.f32.partialorder %v1152, 2.0
        %vm1671 = vcmp.gt.f32.partialorder %v1153, 2.0
        %vm1672 = vcmp.gt.f32.partialorder %v1154, 2.0
        %vm1673 = vcmp.gt.f32.partialorder %v1155, 2.0
        %vm1674 = vcmp.gt.f32.partialorder %v1156, 2.0
        %vm1675 = vcmp.gt.f32.partialorder %v1157, 2.0
        %vm1676 = vcmp.gt.f32.partialorder %v1158, 2.0
        %vm1677 = vcmp.gt.f32.partialorder %v1159, 2.0
        %vm1678 = vcmp.gt.f32.partialorder %v1160, 2.0
        %v1679 = vsel %vm1663, 1, 0
        %v1680 = vsel %vm1664, 1, 0
        %v1681 = vsel %vm1665, 1, 0
        %v1682 = vsel %vm1666, 1, 0
        %v1683 = vsel %vm1667, 1, 0
        %v1684 = vsel %vm1668, 1, 0
        %v1685 = vsel %vm1669, 1, 0
        %v1686 = vsel %vm1670, 1, 0
        %v1687 = vsel %vm1671, 1, 0
        %v1688 = vsel %vm1672, 1, 0
        %v1689 = vsel %vm1673, 1, 0
        %v1690 = vsel %vm1674, 1, 0
        %v1691 = vsel %vm1675, 1, 0
        %v1692 = vsel %vm1676, 1, 0
        %v1693 = vsel %vm1677, 1, 0
        %v1694 = vsel %vm1678, 1, 0
        %1695 = vset.pattern.permute.xlu0 127
        %1696 = vperm.xlu0 %1695, %v1679
        %v1697 = vpop.permute.xlu0 %1696
        %1698 = vset.pattern.permute.xlu0 127
        %1699 = vperm.xlu0 %1698, %v1680
        %v1700 = vpop.permute.xlu0 %1699
        %1701 = vset.pattern.permute.xlu0 127
        %1702 = vperm.xlu0 %1701, %v1681
        %v1703 = vpop.permute.xlu0 %1702
        %1704 = vset.pattern.permute.xlu0 127
        %1705 = vperm.xlu0 %1704, %v1682
        %v1706 = vpop.permute.xlu0 %1705
        %1707 = vset.pattern.permute.xlu0 127
        %1708 = vperm.xlu0 %1707, %v1683
        %v1709 = vpop.permute.xlu0 %1708
        %1710 = vset.pattern.permute.xlu0 127
        %1711 = vperm.xlu0 %1710, %v1684
        %v1712 = vpop.permute.xlu0 %1711
        %1713 = vset.pattern.permute.xlu0 127
        %1714 = vperm.xlu0 %1713, %v1685
        %v1715 = vpop.permute.xlu0 %1714
        %1716 = vset.pattern.permute.xlu0 127
        %1717 = vperm.xlu0 %1716, %v1686
        %v1718 = vpop.permute.xlu0 %1717
        %1719 = vset.pattern.permute.xlu0 127
        %1720 = vperm.xlu0 %1719, %v1687
        %v1721 = vpop.permute.xlu0 %1720
        %1722 = vset.pattern.permute.xlu0 127
        %1723 = vperm.xlu0 %1722, %v1688
        %v1724 = vpop.permute.xlu0 %1723
        %1725 = vset.pattern.permute.xlu0 127
        %1726 = vperm.xlu0 %1725, %v1689
        %v1727 = vpop.permute.xlu0 %1726
        %1728 = vset.pattern.permute.xlu0 127
        %1729 = vperm.xlu0 %1728, %v1690
        %v1730 = vpop.permute.xlu0 %1729
        %1731 = vset.pattern.permute.xlu0 127
        %1732 = vperm.xlu0 %1731, %v1691
        %v1733 = vpop.permute.xlu0 %1732
        %1734 = vset.pattern.permute.xlu0 127
        %1735 = vperm.xlu0 %1734, %v1692
        %v1736 = vpop.permute.xlu0 %1735
        %1737 = vset.pattern.permute.xlu0 127
        %1738 = vperm.xlu0 %1737, %v1693
        %v1739 = vpop.permute.xlu0 %1738
        %1740 = vset.pattern.permute.xlu0 127
        %1741 = vperm.xlu0 %1740, %v1694
        %v1742 = vpop.permute.xlu0 %1741
        %vm1743 = vcmp.eq.s32.totalorder %v1697, 1
        %vm1744 = vcmp.eq.s32.totalorder %v1700, 1
        %vm1745 = vcmp.eq.s32.totalorder %v1703, 1
        %vm1746 = vcmp.eq.s32.totalorder %v1706, 1
        %vm1747 = vcmp.eq.s32.totalorder %v1709, 1
        %vm1748 = vcmp.eq.s32.totalorder %v1712, 1
        %vm1749 = vcmp.eq.s32.totalorder %v1715, 1
        %vm1750 = vcmp.eq.s32.totalorder %v1718, 1
        %vm1751 = vcmp.eq.s32.totalorder %v1721, 1
        %vm1752 = vcmp.eq.s32.totalorder %v1724, 1
        %vm1753 = vcmp.eq.s32.totalorder %v1727, 1
        %vm1754 = vcmp.eq.s32.totalorder %v1730, 1
        %vm1755 = vcmp.eq.s32.totalorder %v1733, 1
        %vm1756 = vcmp.eq.s32.totalorder %v1736, 1
        %vm1757 = vcmp.eq.s32.totalorder %v1739, 1
        %vm1758 = vcmp.eq.s32.totalorder %v1742, 1
        %vm1759 = vmpackc.low %vm1743, %vm1743
        %vm1760 = vmpackc.low %vm1744, %vm1744
        %vm1761 = vmpackc.low %vm1745, %vm1745
        %vm1762 = vmpackc.low %vm1746, %vm1746
        %vm1763 = vmpackc.low %vm1747, %vm1747
        %vm1764 = vmpackc.low %vm1748, %vm1748
        %vm1765 = vmpackc.low %vm1749, %vm1749
        %vm1766 = vmpackc.low %vm1750, %vm1750
        %vm1767 = vmpackc.low %vm1751, %vm1751
        %vm1768 = vmpackc.low %vm1752, %vm1752
        %vm1769 = vmpackc.low %vm1753, %vm1753
        %vm1770 = vmpackc.low %vm1754, %vm1754
        %vm1771 = vmpackc.low %vm1755, %vm1755
        %vm1772 = vmpackc.low %vm1756, %vm1756
        %vm1773 = vmpackc.low %vm1757, %vm1757
        %vm1774 = vmpackc.low %vm1758, %vm1758
        %v1775 = vsel %vm1759, 65537, 0
        %v1776 = vsel %vm1760, 65537, 0
        %v1777 = vsel %vm1761, 65537, 0
        %v1778 = vsel %vm1762, 65537, 0
        %v1779 = vsel %vm1763, 65537, 0
        %v1780 = vsel %vm1764, 65537, 0
        %v1781 = vsel %vm1765, 65537, 0
        %v1782 = vsel %vm1766, 65537, 0
        %v1783 = vsel %vm1767, 65537, 0
        %v1784 = vsel %vm1768, 65537, 0
        %v1785 = vsel %vm1769, 65537, 0
        %v1786 = vsel %vm1770, 65537, 0
        %v1787 = vsel %vm1771, 65537, 0
        %v1788 = vsel %vm1772, 65537, 0
        %v1789 = vsel %vm1773, 65537, 0
        %v1790 = vsel %vm1774, 65537, 0
        %v1791 = vunpack.c.l.b16 %v1775
        %v1792 = vunpack.c.l.b16 %v1776
        %v1793 = vunpack.c.l.b16 %v1777
        %v1794 = vunpack.c.l.b16 %v1778
        %v1795 = vunpack.c.l.b16 %v1779
        %v1796 = vunpack.c.l.b16 %v1780
        %v1797 = vunpack.c.l.b16 %v1781
        %v1798 = vunpack.c.l.b16 %v1782
        %v1799 = vunpack.c.l.b16 %v1783
        %v1800 = vunpack.c.l.b16 %v1784
        %v1801 = vunpack.c.l.b16 %v1785
        %v1802 = vunpack.c.l.b16 %v1786
        %v1803 = vunpack.c.l.b16 %v1787
        %v1804 = vunpack.c.l.b16 %v1788
        %v1805 = vunpack.c.l.b16 %v1789
        %v1806 = vunpack.c.l.b16 %v1790
        %v1807 = vpack.c.b16 %v1792, %v1791
        %v1808 = vpack.c.b16 %v1794, %v1793
        %v1809 = vpack.c.b16 %v1796, %v1795
        %v1810 = vpack.c.b16 %v1798, %v1797
        %v1811 = vpack.c.b16 %v1800, %v1799
        %v1812 = vpack.c.b16 %v1802, %v1801
        %v1813 = vpack.c.b16 %v1804, %v1803
        %v1814 = vpack.c.b16 %v1806, %v1805
        %vm1815 = vcmp.ne.s16.totalorder %v1807, 0
        %vm1816 = vcmp.ne.s16.totalorder %v1808, 0
        %vm1817 = vcmp.ne.s16.totalorder %v1809, 0
        %vm1818 = vcmp.ne.s16.totalorder %v1810, 0
        %vm1819 = vcmp.ne.s16.totalorder %v1811, 0
        %vm1820 = vcmp.ne.s16.totalorder %v1812, 0
        %vm1821 = vcmp.ne.s16.totalorder %v1813, 0
        %vm1822 = vcmp.ne.s16.totalorder %v1814, 0
        %v1823 = vsel %vm1815, %v1655, %v1323
        %v1824 = vsel %vm1816, %v1656, %v1324
        %v1825 = vsel %vm1817, %v1657, %v1325
        %v1826 = vsel %vm1818, %v1658, %v1326
        %v1827 = vsel %vm1819, %v1659, %v1327
        %v1828 = vsel %vm1820, %v1660, %v1328
        %v1829 = vsel %vm1821, %v1661, %v1329
        %v1830 = vsel %vm1822, %v1662, %v1330
        %vm1831 = vcmp.eq.f32.partialorder %v1161, 3.0
        %vm1832 = vcmp.eq.f32.partialorder %v1162, 3.0
        %vm1833 = vcmp.eq.f32.partialorder %v1163, 3.0
        %vm1834 = vcmp.eq.f32.partialorder %v1164, 3.0
        %vm1835 = vcmp.eq.f32.partialorder %v1165, 3.0
        %vm1836 = vcmp.eq.f32.partialorder %v1166, 3.0
        %vm1837 = vcmp.eq.f32.partialorder %v1167, 3.0
        %vm1838 = vcmp.eq.f32.partialorder %v1168, 3.0
        %vm1839 = vcmp.eq.f32.partialorder %v1169, 3.0
        %vm1840 = vcmp.eq.f32.partialorder %v1170, 3.0
        %vm1841 = vcmp.eq.f32.partialorder %v1171, 3.0
        %vm1842 = vcmp.eq.f32.partialorder %v1172, 3.0
        %vm1843 = vcmp.eq.f32.partialorder %v1173, 3.0
        %vm1844 = vcmp.eq.f32.partialorder %v1174, 3.0
        %vm1845 = vcmp.eq.f32.partialorder %v1175, 3.0
        %vm1846 = vcmp.eq.f32.partialorder %v1176, 3.0
        %vm1847 = vmpackc.low %vm1832, %vm1831
        %vm1848 = vmpackc.low %vm1834, %vm1833
        %vm1849 = vmpackc.low %vm1836, %vm1835
        %vm1850 = vmpackc.low %vm1838, %vm1837
        %vm1851 = vmpackc.low %vm1840, %vm1839
        %vm1852 = vmpackc.low %vm1842, %vm1841
        %vm1853 = vmpackc.low %vm1844, %vm1843
        %vm1854 = vmpackc.low %vm1846, %vm1845
        %v1855 = vsel %vm1847, %v1331, 0
        %v1856 = vsel %vm1848, %v1332, 0
        %v1857 = vsel %vm1849, %v1333, 0
        %v1858 = vsel %vm1850, %v1334, 0
        %v1859 = vsel %vm1851, %v1335, 0
        %v1860 = vsel %vm1852, %v1336, 0
        %v1861 = vsel %vm1853, %v1337, 0
        %v1862 = vsel %vm1854, %v1338, 0
        %vm1863 = vcmp.gt.f32.partialorder %v1145, 3.0
        %vm1864 = vcmp.gt.f32.partialorder %v1146, 3.0
        %vm1865 = vcmp.gt.f32.partialorder %v1147, 3.0
        %vm1866 = vcmp.gt.f32.partialorder %v1148, 3.0
        %vm1867 = vcmp.gt.f32.partialorder %v1149, 3.0
        %vm1868 = vcmp.gt.f32.partialorder %v1150, 3.0
        %vm1869 = vcmp.gt.f32.partialorder %v1151, 3.0
        %vm1870 = vcmp.gt.f32.partialorder %v1152, 3.0
        %vm1871 = vcmp.gt.f32.partialorder %v1153, 3.0
        %vm1872 = vcmp.gt.f32.partialorder %v1154, 3.0
        %vm1873 = vcmp.gt.f32.partialorder %v1155, 3.0
        %vm1874 = vcmp.gt.f32.partialorder %v1156, 3.0
        %vm1875 = vcmp.gt.f32.partialorder %v1157, 3.0
        %vm1876 = vcmp.gt.f32.partialorder %v1158, 3.0
        %vm1877 = vcmp.gt.f32.partialorder %v1159, 3.0
        %vm1878 = vcmp.gt.f32.partialorder %v1160, 3.0
        %v1879 = vsel %vm1863, 1, 0
        %v1880 = vsel %vm1864, 1, 0
        %v1881 = vsel %vm1865, 1, 0
        %v1882 = vsel %vm1866, 1, 0
        %v1883 = vsel %vm1867, 1, 0
        %v1884 = vsel %vm1868, 1, 0
        %v1885 = vsel %vm1869, 1, 0
        %v1886 = vsel %vm1870, 1, 0
        %v1887 = vsel %vm1871, 1, 0
        %v1888 = vsel %vm1872, 1, 0
        %v1889 = vsel %vm1873, 1, 0
        %v1890 = vsel %vm1874, 1, 0
        %v1891 = vsel %vm1875, 1, 0
        %v1892 = vsel %vm1876, 1, 0
        %v1893 = vsel %vm1877, 1, 0
        %v1894 = vsel %vm1878, 1, 0
        %1895 = vset.pattern.permute.xlu0 127
        %1896 = vperm.xlu0 %1895, %v1879
        %v1897 = vpop.permute.xlu0 %1896
        %1898 = vset.pattern.permute.xlu0 127
        %1899 = vperm.xlu0 %1898, %v1880
        %v1900 = vpop.permute.xlu0 %1899
        %1901 = vset.pattern.permute.xlu0 127
        %1902 = vperm.xlu0 %1901, %v1881
        %v1903 = vpop.permute.xlu0 %1902
        %1904 = vset.pattern.permute.xlu0 127
        %1905 = vperm.xlu0 %1904, %v1882
        %v1906 = vpop.permute.xlu0 %1905
        %1907 = vset.pattern.permute.xlu0 127
        %1908 = vperm.xlu0 %1907, %v1883
        %v1909 = vpop.permute.xlu0 %1908
        %1910 = vset.pattern.permute.xlu0 127
        %1911 = vperm.xlu0 %1910, %v1884
        %v1912 = vpop.permute.xlu0 %1911
        %1913 = vset.pattern.permute.xlu0 127
        %1914 = vperm.xlu0 %1913, %v1885
        %v1915 = vpop.permute.xlu0 %1914
        %1916 = vset.pattern.permute.xlu0 127
        %1917 = vperm.xlu0 %1916, %v1886
        %v1918 = vpop.permute.xlu0 %1917
        %1919 = vset.pattern.permute.xlu0 127
        %1920 = vperm.xlu0 %1919, %v1887
        %v1921 = vpop.permute.xlu0 %1920
        %1922 = vset.pattern.permute.xlu0 127
        %1923 = vperm.xlu0 %1922, %v1888
        %v1924 = vpop.permute.xlu0 %1923
        %1925 = vset.pattern.permute.xlu0 127
        %1926 = vperm.xlu0 %1925, %v1889
        %v1927 = vpop.permute.xlu0 %1926
        %1928 = vset.pattern.permute.xlu0 127
        %1929 = vperm.xlu0 %1928, %v1890
        %v1930 = vpop.permute.xlu0 %1929
        %1931 = vset.pattern.permute.xlu0 127
        %1932 = vperm.xlu0 %1931, %v1891
        %v1933 = vpop.permute.xlu0 %1932
        %1934 = vset.pattern.permute.xlu0 127
        %1935 = vperm.xlu0 %1934, %v1892
        %v1936 = vpop.permute.xlu0 %1935
        %1937 = vset.pattern.permute.xlu0 127
        %1938 = vperm.xlu0 %1937, %v1893
        %v1939 = vpop.permute.xlu0 %1938
        %1940 = vset.pattern.permute.xlu0 127
        %1941 = vperm.xlu0 %1940, %v1894
        %v1942 = vpop.permute.xlu0 %1941
        %vm1943 = vcmp.eq.s32.totalorder %v1897, 1
        %vm1944 = vcmp.eq.s32.totalorder %v1900, 1
        %vm1945 = vcmp.eq.s32.totalorder %v1903, 1
        %vm1946 = vcmp.eq.s32.totalorder %v1906, 1
        %vm1947 = vcmp.eq.s32.totalorder %v1909, 1
        %vm1948 = vcmp.eq.s32.totalorder %v1912, 1
        %vm1949 = vcmp.eq.s32.totalorder %v1915, 1
        %vm1950 = vcmp.eq.s32.totalorder %v1918, 1
        %vm1951 = vcmp.eq.s32.totalorder %v1921, 1
        %vm1952 = vcmp.eq.s32.totalorder %v1924, 1
        %vm1953 = vcmp.eq.s32.totalorder %v1927, 1
        %vm1954 = vcmp.eq.s32.totalorder %v1930, 1
        %vm1955 = vcmp.eq.s32.totalorder %v1933, 1
        %vm1956 = vcmp.eq.s32.totalorder %v1936, 1
        %vm1957 = vcmp.eq.s32.totalorder %v1939, 1
        %vm1958 = vcmp.eq.s32.totalorder %v1942, 1
        %vm1959 = vmpackc.low %vm1943, %vm1943
        %vm1960 = vmpackc.low %vm1944, %vm1944
        %vm1961 = vmpackc.low %vm1945, %vm1945
        %vm1962 = vmpackc.low %vm1946, %vm1946
        %vm1963 = vmpackc.low %vm1947, %vm1947
        %vm1964 = vmpackc.low %vm1948, %vm1948
        %vm1965 = vmpackc.low %vm1949, %vm1949
        %vm1966 = vmpackc.low %vm1950, %vm1950
        %vm1967 = vmpackc.low %vm1951, %vm1951
        %vm1968 = vmpackc.low %vm1952, %vm1952
        %vm1969 = vmpackc.low %vm1953, %vm1953
        %vm1970 = vmpackc.low %vm1954, %vm1954
        %vm1971 = vmpackc.low %vm1955, %vm1955
        %vm1972 = vmpackc.low %vm1956, %vm1956
        %vm1973 = vmpackc.low %vm1957, %vm1957
        %vm1974 = vmpackc.low %vm1958, %vm1958
        %v1975 = vsel %vm1959, 65537, 0
        %v1976 = vsel %vm1960, 65537, 0
        %v1977 = vsel %vm1961, 65537, 0
        %v1978 = vsel %vm1962, 65537, 0
        %v1979 = vsel %vm1963, 65537, 0
        %v1980 = vsel %vm1964, 65537, 0
        %v1981 = vsel %vm1965, 65537, 0
        %v1982 = vsel %vm1966, 65537, 0
        %v1983 = vsel %vm1967, 65537, 0
        %v1984 = vsel %vm1968, 65537, 0
        %v1985 = vsel %vm1969, 65537, 0
        %v1986 = vsel %vm1970, 65537, 0
        %v1987 = vsel %vm1971, 65537, 0
        %v1988 = vsel %vm1972, 65537, 0
        %v1989 = vsel %vm1973, 65537, 0
        %v1990 = vsel %vm1974, 65537, 0
        %v1991 = vunpack.c.l.b16 %v1975
        %v1992 = vunpack.c.l.b16 %v1976
        %v1993 = vunpack.c.l.b16 %v1977
        %v1994 = vunpack.c.l.b16 %v1978
        %v1995 = vunpack.c.l.b16 %v1979
        %v1996 = vunpack.c.l.b16 %v1980
        %v1997 = vunpack.c.l.b16 %v1981
        %v1998 = vunpack.c.l.b16 %v1982
        %v1999 = vunpack.c.l.b16 %v1983
        %v2000 = vunpack.c.l.b16 %v1984
        %v2001 = vunpack.c.l.b16 %v1985
        %v2002 = vunpack.c.l.b16 %v1986
        %v2003 = vunpack.c.l.b16 %v1987
        %v2004 = vunpack.c.l.b16 %v1988
        %v2005 = vunpack.c.l.b16 %v1989
        %v2006 = vunpack.c.l.b16 %v1990
        %v2007 = vpack.c.b16 %v1992, %v1991
        %v2008 = vpack.c.b16 %v1994, %v1993
        %v2009 = vpack.c.b16 %v1996, %v1995
        %v2010 = vpack.c.b16 %v1998, %v1997
        %v2011 = vpack.c.b16 %v2000, %v1999
        %v2012 = vpack.c.b16 %v2002, %v2001
        %v2013 = vpack.c.b16 %v2004, %v2003
        %v2014 = vpack.c.b16 %v2006, %v2005
        %vm2015 = vcmp.ne.s16.totalorder %v2007, 0
        %vm2016 = vcmp.ne.s16.totalorder %v2008, 0
        %vm2017 = vcmp.ne.s16.totalorder %v2009, 0
        %vm2018 = vcmp.ne.s16.totalorder %v2010, 0
        %vm2019 = vcmp.ne.s16.totalorder %v2011, 0
        %vm2020 = vcmp.ne.s16.totalorder %v2012, 0
        %vm2021 = vcmp.ne.s16.totalorder %v2013, 0
        %vm2022 = vcmp.ne.s16.totalorder %v2014, 0
        %v2023 = vsel %vm2015, %v1855, %v1323
        %v2024 = vsel %vm2016, %v1856, %v1324
        %v2025 = vsel %vm2017, %v1857, %v1325
        %v2026 = vsel %vm2018, %v1858, %v1326
        %v2027 = vsel %vm2019, %v1859, %v1327
        %v2028 = vsel %vm2020, %v1860, %v1328
        %v2029 = vsel %vm2021, %v1861, %v1329
        %v2030 = vsel %vm2022, %v1862, %v1330
        %2031 = vmatprep.subr.bf16.mxu0 0
        %2032 = vmatpush1.bf16.xpose.msra.mxu0 %v1423
        %2033 = vmatprep.subr.bf16.mxu0 0
        %2034 = vmatpush1.bf16.xpose.msra.mxu0 %v1424
        %2035 = vmatprep.subr.bf16.mxu0 0
        %2036 = vmatpush1.bf16.xpose.msra.mxu0 %v1425
        %2037 = vmatprep.subr.bf16.mxu0 0
        %2038 = vmatpush1.bf16.xpose.msra.mxu0 %v1426
        %2039 = vmatprep.subr.bf16.mxu0 0
        %2040 = vmatpush1.bf16.xpose.msra.mxu0 %v1427
        %2041 = vmatprep.subr.bf16.mxu0 0
        %2042 = vmatpush1.bf16.xpose.msra.mxu0 %v1428
        %2043 = vmatprep.subr.bf16.mxu0 0
        %2044 = vmatpush1.bf16.xpose.msra.mxu0 %v1429
        %2045 = vmatprep.subr.bf16.mxu0 0
        %2046 = vmatpush1.bf16.xpose.msra.mxu0 %v1430
        %2047 = vmatprep.subr.bf16.mxu0 0
        %2048 = vmatpush1.bf16.xpose.msra.mxu0 %v1623
        %2049 = vmatprep.subr.bf16.mxu0 0
        %2050 = vmatpush1.bf16.xpose.msra.mxu0 %v1624
        %2051 = vmatprep.subr.bf16.mxu0 0
        %2052 = vmatpush1.bf16.xpose.msra.mxu0 %v1625
        %2053 = vmatprep.subr.bf16.mxu0 0
        %2054 = vmatpush1.bf16.xpose.msra.mxu0 %v1626
        %2055 = vmatprep.subr.bf16.mxu0 0
        %2056 = vmatpush1.bf16.xpose.msra.mxu0 %v1627
        %2057 = vmatprep.subr.bf16.mxu0 0
        %2058 = vmatpush1.bf16.xpose.msra.mxu0 %v1628
        %2059 = vmatprep.subr.bf16.mxu0 0
        %2060 = vmatpush1.bf16.xpose.msra.mxu0 %v1629
        %2061 = vmatprep.subr.bf16.mxu0 0
        %2062 = vmatpush1.bf16.xpose.msra.mxu0 %v1630
        %2063 = vmatprep.mubr.bf16.mxu0 0
        %2064 = vmatmul.mubr.bf16.gmra.mrb[0].mxu0 %v1342
        %v2065 = vpop.f32.mrb[0].mxu0
        %v2066 = vadd.f32 0.0, %v2065
        %v2067 = vpop.f32.mrb[0].mxu0
        %v2068 = vadd.f32 0.0, %v2067
        %v2069 = vpop.f32.mrb[0].mxu0
        %v2070 = vpop.f32.mrb[0].mxu0
        %2071 = vdwg.mxu0
        %2072 = vmatprep.subr.bf16.mxu0 0
        %2073 = vmatpush1.bf16.xpose.msra.mxu0 %v1823
        %2074 = vmatprep.subr.bf16.mxu0 0
        %2075 = vmatpush1.bf16.xpose.msra.mxu0 %v1824
        %2076 = vmatprep.subr.bf16.mxu0 0
        %2077 = vmatpush1.bf16.xpose.msra.mxu0 %v1825
        %2078 = vmatprep.subr.bf16.mxu0 0
        %2079 = vmatpush1.bf16.xpose.msra.mxu0 %v1826
        %2080 = vmatprep.subr.bf16.mxu0 0
        %2081 = vmatpush1.bf16.xpose.msra.mxu0 %v1827
        %2082 = vmatprep.subr.bf16.mxu0 0
        %2083 = vmatpush1.bf16.xpose.msra.mxu0 %v1828
        %2084 = vmatprep.subr.bf16.mxu0 0
        %2085 = vmatpush1.bf16.xpose.msra.mxu0 %v1829
        %2086 = vmatprep.subr.bf16.mxu0 0
        %2087 = vmatpush1.bf16.xpose.msra.mxu0 %v1830
        %2088 = vmatprep.subr.bf16.mxu0 0
        %2089 = vmatpush1.bf16.xpose.msra.mxu0 %v2023
        %2090 = vmatprep.subr.bf16.mxu0 0
        %2091 = vmatpush1.bf16.xpose.msra.mxu0 %v2024
        %2092 = vmatprep.subr.bf16.mxu0 0
        %2093 = vmatpush1.bf16.xpose.msra.mxu0 %v2025
        %2094 = vmatprep.subr.bf16.mxu0 0
        %2095 = vmatpush1.bf16.xpose.msra.mxu0 %v2026
        %2096 = vmatprep.subr.bf16.mxu0 0
        %2097 = vmatpush1.bf16.xpose.msra.mxu0 %v2027
        %2098 = vmatprep.subr.bf16.mxu0 0
        %2099 = vmatpush1.bf16.xpose.msra.mxu0 %v2028
        %2100 = vmatprep.subr.bf16.mxu0 0
        %2101 = vmatpush1.bf16.xpose.msra.mxu0 %v2029
        %2102 = vmatprep.subr.bf16.mxu0 0
        %2103 = vmatpush1.bf16.xpose.msra.mxu0 %v2030
        %2104 = vmatprep.mubr.bf16.mxu0 0
        %2105 = vmatmul.mubr.bf16.gmra.mrb[0].mxu0 %v1342
        %v2106 = vpop.f32.mrb[0].mxu0
        %v2107 = vadd.f32 0.0, %v2106
        %v2108 = vpop.f32.mrb[0].mxu0
        %v2109 = vadd.f32 0.0, %v2108
        %v2110 = vpop.f32.mrb[0].mxu0
        %v2111 = vpop.f32.mrb[0].mxu0
        %2112 = vdwg.mxu0
        %2113 = vmatprep.subr.bf16.mxu0 0
        %2114 = vmatpush1.bf16.xpose.msra.mxu0 %v1423
        %2115 = vmatprep.subr.bf16.mxu0 0
        %2116 = vmatpush1.bf16.xpose.msra.mxu0 %v1424
        %2117 = vmatprep.subr.bf16.mxu0 0
        %2118 = vmatpush1.bf16.xpose.msra.mxu0 %v1425
        %2119 = vmatprep.subr.bf16.mxu0 0
        %2120 = vmatpush1.bf16.xpose.msra.mxu0 %v1426
        %2121 = vmatprep.subr.bf16.mxu0 0
        %2122 = vmatpush1.bf16.xpose.msra.mxu0 %v1427
        %2123 = vmatprep.subr.bf16.mxu0 0
        %2124 = vmatpush1.bf16.xpose.msra.mxu0 %v1428
        %2125 = vmatprep.subr.bf16.mxu0 0
        %2126 = vmatpush1.bf16.xpose.msra.mxu0 %v1429
        %2127 = vmatprep.subr.bf16.mxu0 0
        %2128 = vmatpush1.bf16.xpose.msra.mxu0 %v1430
        %2129 = vmatprep.subr.bf16.mxu0 0
        %2130 = vmatpush1.bf16.xpose.msra.mxu0 %v1623
        %2131 = vmatprep.subr.bf16.mxu0 0
        %2132 = vmatpush1.bf16.xpose.msra.mxu0 %v1624
        %2133 = vmatprep.subr.bf16.mxu0 0
        %2134 = vmatpush1.bf16.xpose.msra.mxu0 %v1625
        %2135 = vmatprep.subr.bf16.mxu0 0
        %2136 = vmatpush1.bf16.xpose.msra.mxu0 %v1626
        %2137 = vmatprep.subr.bf16.mxu0 0
        %2138 = vmatpush1.bf16.xpose.msra.mxu0 %v1627
        %2139 = vmatprep.subr.bf16.mxu0 0
        %2140 = vmatpush1.bf16.xpose.msra.mxu0 %v1628
        %2141 = vmatprep.subr.bf16.mxu0 0
        %2142 = vmatpush1.bf16.xpose.msra.mxu0 %v1629
        %2143 = vmatprep.subr.bf16.mxu0 0
        %2144 = vmatpush1.bf16.xpose.msra.mxu0 %v1630
        %2145 = vmatprep.mubr.bf16.mxu0 0
        %2146 = vmatmul.mubr.bf16.gmra.mrb[0].mxu0 %v1339
        %v2147 = vpop.f32.mrb[0].mxu0
        %v2148 = vadd.f32 %v2066, %v2147
        %v2149 = vpop.f32.mrb[0].mxu0
        %v2150 = vadd.f32 %v2068, %v2149
        %v2151 = vpop.f32.mrb[0].mxu0
        %v2152 = vpop.f32.mrb[0].mxu0
        %2153 = vdwg.mxu0
        %2154 = vmatprep.subr.bf16.mxu0 0
        %2155 = vmatpush1.bf16.xpose.msra.mxu0 %v1823
        %2156 = vmatprep.subr.bf16.mxu0 0
        %2157 = vmatpush1.bf16.xpose.msra.mxu0 %v1824
        %2158 = vmatprep.subr.bf16.mxu0 0
        %2159 = vmatpush1.bf16.xpose.msra.mxu0 %v1825
        %2160 = vmatprep.subr.bf16.mxu0 0
        %2161 = vmatpush1.bf16.xpose.msra.mxu0 %v1826
        %2162 = vmatprep.subr.bf16.mxu0 0
        %2163 = vmatpush1.bf16.xpose.msra.mxu0 %v1827
        %2164 = vmatprep.subr.bf16.mxu0 0
        %2165 = vmatpush1.bf16.xpose.msra.mxu0 %v1828
        %2166 = vmatprep.subr.bf16.mxu0 0
        %2167 = vmatpush1.bf16.xpose.msra.mxu0 %v1829
        %2168 = vmatprep.subr.bf16.mxu0 0
        %2169 = vmatpush1.bf16.xpose.msra.mxu0 %v1830
        %2170 = vmatprep.subr.bf16.mxu0 0
        %2171 = vmatpush1.bf16.xpose.msra.mxu0 %v2023
        %2172 = vmatprep.subr.bf16.mxu0 0
        %2173 = vmatpush1.bf16.xpose.msra.mxu0 %v2024
        %2174 = vmatprep.subr.bf16.mxu0 0
        %2175 = vmatpush1.bf16.xpose.msra.mxu0 %v2025
        %2176 = vmatprep.subr.bf16.mxu0 0
        %2177 = vmatpush1.bf16.xpose.msra.mxu0 %v2026
        %2178 = vmatprep.subr.bf16.mxu0 0
        %2179 = vmatpush1.bf16.xpose.msra.mxu0 %v2027
        %2180 = vmatprep.subr.bf16.mxu0 0
        %2181 = vmatpush1.bf16.xpose.msra.mxu0 %v2028
        %2182 = vmatprep.subr.bf16.mxu0 0
        %2183 = vmatpush1.bf16.xpose.msra.mxu0 %v2029
        %2184 = vmatprep.subr.bf16.mxu0 0
        %2185 = vmatpush1.bf16.xpose.msra.mxu0 %v2030
        %2186 = vmatprep.mubr.bf16.mxu0 0
        %2187 = vmatmul.mubr.bf16.gmra.mrb[0].mxu0 %v1339
        %v2188 = vpop.f32.mrb[0].mxu0
        %v2189 = vadd.f32 %v2107, %v2188
        %v2190 = vpop.f32.mrb[0].mxu0
        %v2191 = vadd.f32 %v2109, %v2190
        %v2192 = vpop.f32.mrb[0].mxu0
        %v2193 = vpop.f32.mrb[0].mxu0
        %2194 = vdwg.mxu0
        %v2195 = vsub.f32 %v2148, %v309
        %2196 = vst [vmem:[%s262] sm:$0xff] %v2195
        %v2197 = vsub.f32 %v2150, %v309
        %s2198 = scalar_lea.vmem %s262, 8 [#allocation2]
        %2199 = vst [vmem:[%s2198] sm:$0xff] %v2197
        %v2200 = vsub.f32 %v2189, %v309
        %s2201 = scalar_lea.vmem %s262, 16 [#allocation2]
        %2202 = vst [vmem:[%s2201] sm:$0xff] %v2200
        %v2203 = vsub.f32 %v2191, %v309
        %s2204 = scalar_lea.vmem %s262, 24 [#allocation2]
        %2205 = vst [vmem:[%s2204] sm:$0xff] %v2203
        %s2206 = sand.u32 %s148, 1
        %s2207 = scalar_lea.sflag [#allocation3], %s2206
        %s2208 = sand.u32 %s148, 1
        %s2209 = smul.addr %s2208, 32
        %s2210 = scalar_lea.vmem [#allocation2], %s2209
        // Predicated region
        $region37: #{tpu_custom_call.1} parent=35 // pred_check
          %p2211 = pneg %p158
        $region38: #{tpu_custom_call.1} parent=35 // pred_check_branch
          %2213 = sbr.rel (%p2211) target = $region40
        $region39: #{tpu_custom_call.1} parent=35 // pred_region
          %s2215 = ssub.s32 512, 512
          %2216 = vsyncadd %s2207, %s2215
          %s2217 = smul.addr %s22, 4
          %s2218 = sadd.s32 %s23, %s2217
          %s2219 = smul.addr %s2218, 128
          %s2220 = scalar_lea.hbm %s4, %s2219
          %s2221 = sshll.u32 %s2210, 4
          %s2222 = int_to_ptr.vmem [resolvable:$true] %s2221
          %2227 = dma.vmem_to_hbm [thread:$0]  %s2222, 512, %s2220, %s2207, 128, 128, 8
        $region40: #{tpu_custom_call.1} parent=35 // pred_fallthru
          _
      $region36: #{tpu_custom_call.1} parent=5 // pred_fallthru
        _
      %p2228 = scmp.le.s32.totalorder 2, %s13
      // Predicated region
      $region41: #{tpu_custom_call.1} parent=5 // pred_check
        %p2229 = pneg %p2228
      $region42: #{tpu_custom_call.1} parent=5 // pred_check_branch
        %2231 = sbr.rel (%p2229) target = $region44
      $region43: #{tpu_custom_call.1} parent=5 // pred_region
        %s2232 = ssub.s32 %s13, 2
        // Predicated region
        $region45: #{tpu_custom_call.1} parent=43 // pred_check
          %p2233 = pneg %p164
        $region46: #{tpu_custom_call.1} parent=43 // pred_check_branch
          %2235 = sbr.rel (%p2233) target = $region48
        $region47: #{tpu_custom_call.1} parent=43 // pred_region
          %s2236 = sand.u32 %s149, 1
          %s2237 = scalar_lea.sflag [#allocation3], %s2236
          %s2238 = sand.u32 %s149, 1
          %s2239 = smul.addr %s2238, 32
          %s2240 = scalar_lea.vmem [#allocation2], %s2239
          %2241 = dma.done %s2237, 512
        $region48: #{tpu_custom_call.1} parent=43 // pred_fallthru
          _
      $region44: #{tpu_custom_call.1} parent=5 // pred_fallthru
        _
    $region6: #{tpu_custom_call.1} parent=1 // loop_footer
      %s17 = sadd.s32 1, %s13
    $region7: #{tpu_custom_call.1} parent=1 // loop_footer_branch
      %12 = sbr.rel target = $region3
    $region8: #{tpu_custom_call.1} parent=1 // loop_exit
      _
    %2242 = vsyncpa [#allocation3], 1
    %s2243 = scalar_lea.sflag [#allocation3], 1
    %2244 = vsyncpa %s2243, 1

</llo_original>
